<compile_context>
chip_gen: v6e
topology: v6e:2x2x1
jax: 0.10.0
libtpu: 0.0.40
codegen_flags: <defaults>
</compile_context>

<pallas_src>
import jax
import jax.numpy as jnp
import numpy as np
from jax import lax
from jax.experimental import pallas as pl
from jax.experimental.pallas import tpu as pltpu

EPS = 1e-5


# ----------------------------- Pallas kernel --------------------------------
def _unit_kernel(x_ref, w1_ref, wg_ref, wdw_ref, sb_ref, o_ref):
    bt, H, W, CL = x_ref.shape
    M = bt * H * W

    # ---- 1x1 grouped conv #1 (densified, shuffle + BN1 scale folded into weights) ----
    x_bf = x_ref[...].reshape(M, CL).astype(jnp.bfloat16)
    y1 = jnp.dot(x_bf, w1_ref[...], preferred_element_type=jnp.float32)
    y1 = jnp.maximum(y1 + sb_ref[0:1, :], 0.0)                 # + b1, ReLU (f32)

    # ---- depthwise 3x3, stride 1, pad 1 — in registers, small live set ----
    # BN2 scale is folded into the taps; BN2 bias is folded through the 2nd 1x1 conv.
    y3 = y1.reshape(bt * H, W, CL)
    w_ids = lax.broadcasted_iota(jnp.int32, (1, W, CL), 1)
    mask_l = jnp.where(w_ids >= 1, 1.0, 0.0)                   # kill wrap at w == 0
    mask_r = jnp.where(w_ids <= W - 2, 1.0, 0.0)               # kill wrap at w == W-1
    left = (pltpu.roll(y3, 1, axis=1) * mask_l).reshape(bt, H, W, CL)       # y[., w-1]
    right = (pltpu.roll(y3, W - 1, axis=1) * mask_r).reshape(bt, H, W, CL)  # y[., w+1]
    y4 = y1.reshape(bt, H, W, CL)

    k = wdw_ref[...]                                           # (9, CL) taps * s2

    def tap(i):
        return k[i:i + 1, :].reshape(1, 1, 1, CL)

    zrow = jnp.zeros((bt, 1, W, CL), jnp.float32)
    # kh = 1 (same row)
    dw = left * tap(3) + y4 * tap(4) + right * tap(5)
    # kh = 0 (row above): out[h] += top[h-1]
    top = left * tap(0) + y4 * tap(1) + right * tap(2)
    dw = dw + jnp.concatenate([zrow, top[:, :H - 1]], axis=1)
    # kh = 2 (row below): out[h] += bot[h+1]
    bot = left * tap(6) + y4 * tap(7) + right * tap(8)
    dw = dw + jnp.concatenate([bot[:, 1:], zrow], axis=1)

    # ---- 1x1 grouped conv #2 (densified, BN3 scale folded) + bias + ReLU ----
    z = jnp.dot(dw.reshape(M, CL).astype(jnp.bfloat16), wg_ref[...],
                preferred_element_type=jnp.float32)
    z = jnp.maximum(z + sb_ref[1:2, :], 0.0)                   # + (b3 + b2 @ Wg_s3)

    # ---- residual add + final ReLU (stride == 1 path); re-read x in f32 ----
    out = jnp.maximum(x_ref[...].reshape(M, CL) + z, 0.0)
    o_ref[...] = out.reshape(bt, H, W, CL)


# ------------------------------ JAX wrapper ----------------------------------
def _shuffle_perm(channels, groups):
    # channel shuffle: out[c] = in[(c % groups) * (channels // groups) + c // groups]
    cg = channels // groups
    return np.array([(c % groups) * cg + c // groups for c in range(channels)], np.int32)


def _densify_group_conv1x1(w, groups):
    # w: (Cout, Cin//groups, 1, 1) -> dense block-diagonal (Cin, Cout)
    cout, cin_g = w.shape[0], w.shape[1]
    cin, cout_g = cin_g * groups, cout // groups
    w2 = w[:, :, 0, 0]
    dense = jnp.zeros((cin, cout), jnp.float32)
    for g in range(groups):
        blk = w2[g * cout_g:(g + 1) * cout_g, :]               # (cout_g, cin_g)
        dense = dense.at[g * cin_g:(g + 1) * cin_g,
                         g * cout_g:(g + 1) * cout_g].set(blk.T)
    return dense


def _fold_bn(bn):
    gamma, beta, mean, var = bn
    s = gamma * lax.rsqrt(var + EPS)
    return s, beta - mean * s


def _vmem_budget_bytes():
    # Generation-aware: v7x has 64 MiB VMEM/TC, v5e/v6e have 128 MiB.
    try:
        cap = pltpu.get_tpu_info().vmem_capacity_bytes
    except Exception:
        cap = None
    if cap is None or cap <= (64 << 20):
        return 48 << 20          # conservative on v7x / unknown parts
    return 96 << 20              # v5e / v6e (raise above the 16/32 MiB scoped default)


def _pick_pack_factor(N, C):
    # Pack P images along the lane axis so the channel (lane) dim approaches 128.
    for p in range(max(1, 128 // max(C, 1)), 0, -1):
        if p * C <= 128 and N % p == 0:
            return p
    return 1


def _pick_batch_tile(NB, H, W, CL, budget_bytes):
    # ~2x double-buffered input block + 2x output block + ~8 live f32 intermediates.
    per_img = H * W * CL * 4
    bt = max(1, min(NB, budget_bytes // (12 * per_img)))
    if NB >= 2:
        bt = min(bt, max(1, NB // 2))   # keep grid >= 2 so v7x's 2nd TensorCore gets work
    return int(bt)


def shufflenet_unit_pallas(x_nchw, params, groups):
    """ShuffleNetUnit forward, stride=1 path (identity branch1, residual add, ReLU)."""
    N, C, H, W = x_nchw.shape
    assert C % groups == 0

    # ---- fold BN + channel shuffle into the weights (f32 math, bf16 cast last) ----
    perm = _shuffle_perm(C, groups)
    s1, b1 = _fold_bn(params['bn1'])
    s1, b1 = s1[perm], b1[perm]
    s2, b2 = _fold_bn(params['bn2'])
    s3, b3 = _fold_bn(params['bn3'])

    w1 = _densify_group_conv1x1(params['w1'], groups)[:, perm] * s1[None, :]   # (C, C)
    wg = _densify_group_conv1x1(params['wg'], groups) * s3[None, :]            # (C, C)
    b3_eff = b3 + b2 @ wg            # BN2 bias folded through the 2nd 1x1 conv (f32)

    wdw = jnp.transpose(params['wdw'][:, 0, :, :], (1, 2, 0)).reshape(9, C)
    wdw = wdw * s2[None, :]          # BN2 scale folded into the depthwise taps (exact)

    # ---- pack P images along the lane axis: (N,C,H,W) -> (N/P, H, W, P*C) ----
    P = _pick_pack_factor(N, C)
    CL = P * C
    NB = N // P
    eyeP = jnp.eye(P, dtype=jnp.float32)
    w1p = jnp.kron(eyeP, w1).astype(jnp.bfloat16)          # (CL, CL)
    wgp = jnp.kron(eyeP, wg).astype(jnp.bfloat16)          # (CL, CL)
    wdwp = jnp.tile(wdw, (1, P)).astype(jnp.float32)       # (9, CL)
    sb = jnp.stack([jnp.tile(b1, P), jnp.tile(b3_eff, P)], axis=0).astype(jnp.float32)

    xp = x_nchw.astype(jnp.float32).reshape(NB, P, C, H, W)
    xp = jnp.transpose(xp, (0, 3, 4, 1, 2)).reshape(NB, H, W, CL)

    # ---- tiling (generation-aware VMEM budget, padded tail instead of bt=1) ----
    budget = _vmem_budget_bytes()
    bt = _pick_batch_tile(NB, H, W, CL, budget)
    NBp = ((NB + bt - 1) // bt) * bt
    if NBp != NB:
        xp = jnp.pad(xp, ((0, NBp - NB), (0, 0), (0, 0), (0, 0)))
    grid = (NBp // bt,)

    flops = NBp * H * W * (2 * 2 * CL * CL) + N * H * W * C * (2 * 9 + 12)
    bytes_accessed = 2 * NBp * H * W * CL * 4 + 2 * CL * CL * 2 + 11 * CL * 4

    def const(a):
        return pl.BlockSpec(a.shape, lambda n, _nd=a.ndim: (0,) * _nd)

    out = pl.pallas_call(
        _unit_kernel,
        out_shape=jax.ShapeDtypeStruct((NBp, H, W, CL), jnp.float32),
        grid_spec=pltpu.PrefetchScalarGridSpec(
            num_scalar_prefetch=0,
            grid=grid,
            in_specs=[pl.BlockSpec((bt, H, W, CL), lambda n: (n, 0, 0, 0)),
                      const(w1p), const(wgp), const(wdwp), const(sb)],
            out_specs=pl.BlockSpec((bt, H, W, CL), lambda n: (n, 0, 0, 0))),
        compiler_params=pltpu.CompilerParams(
            dimension_semantics=("parallel",),
            vmem_limit_bytes=budget),
        cost_estimate=pl.CostEstimate(flops=flops, transcendentals=0,
                                      bytes_accessed=bytes_accessed),
    )(xp, w1p, wgp, wdwp, sb)

    # unpack lanes -> batch, back to the PyTorch NCHW interface
    out = out[:NB].reshape(NB, H, W, P, C)
    out = jnp.transpose(out, (0, 3, 4, 1, 2)).reshape(N, C, H, W)
    return out


# -------------------- deterministic params + pure-JAX reference --------------
def init_params(key, inp, oup, groups):
    assert inp == oup  # stride==1 residual path requires inp == oup
    ks = jax.random.split(key, 6)

    def bn_init(k, c):
        k1, k2, k3, k4 = jax.random.split(k, 4)
        gamma = 1.0 + 0.1 * jax.random.normal(k1, (c,), jnp.float32)
        beta = 0.1 * jax.random.normal(k2, (c,), jnp.float32)
        mean = 0.1 * jax.random.normal(k3, (c,), jnp.float32)
        var = jax.random.uniform(k4, (c,), jnp.float32, minval=0.5, maxval=1.5)
        return (gamma, beta, mean, var)

    return {
        'w1': 0.2 * jax.random.normal(ks[0], (inp, inp // groups, 1, 1), jnp.float32),
        'bn1': bn_init(ks[1], inp),
        'wdw': 0.2 * jax.random.normal(ks[2], (oup, 1, 3, 3), jnp.float32),
        'bn2': bn_init(ks[3], oup),
        'wg': 0.2 * jax.random.normal(ks[4], (oup, oup // groups, 1, 1), jnp.float32),
        'bn3': bn_init(ks[5], oup),
    }


def ref_forward(x, p, groups):
    # Pure-f32 reference of the PyTorch module math (stride=1 path).
    dn = ('NCHW', 'OIHW', 'NCHW')

    def bn(y, prm):
        g, b, m, v = prm
        s = g / jnp.sqrt(v + EPS)
        return y * s[None, :, None, None] + (b - m * s)[None, :, None, None]

    y = lax.conv_general_dilated(x, p['w1'], (1, 1), 'VALID',
                                 dimension_numbers=dn, feature_group_count=groups)
    y = jax.nn.relu(bn(y, p['bn1']))
    N, C, H, W = y.shape
    y = y.reshape(N, groups, C // groups, H, W).transpose(0, 2, 1, 3, 4).reshape(N, C, H, W)
    y = lax.conv_general_dilated(y, p['wdw'], (1, 1), ((1, 1), (1, 1)),
                                 dimension_numbers=dn, feature_group_count=C)
    y = bn(y, p['bn2'])
    y = lax.conv_general_dilated(y, p['wg'], (1, 1), 'VALID',
                                 dimension_numbers=dn, feature_group_count=groups)
    y = jax.nn.relu(bn(y, p['bn3']))
    return jax.nn.relu(x + y)


if __name__ == "__main__":
    key = jax.random.PRNGKey(0)
    kx, kp1, kp2 = jax.random.split(key, 3)
    N, C, H, W = 8, 32, 16, 16
    x = jax.random.normal(kx, (N, C, H, W), jnp.float32)

    ok = True
    for groups, kp in ((1, kp1), (2, kp2)):
        params = init_params(kp, C, C, groups)
        out = jax.block_until_ready(shufflenet_unit_pallas(x, params, groups))
        ref = jax.block_until_ready(ref_forward(x, params, groups))
        err = float(jnp.max(jnp.abs(out - ref)))
        # bf16-level tolerance: the two 1x1 convs run on the MXU with bf16 operands
        # (BN scales folded into the weights); depthwise/residual math stays f32.
        if not np.allclose(np.asarray(out), np.asarray(ref), rtol=5e-2, atol=5e-2):
            ok = False
            print("mismatch vs f32 ref, groups=%d, max abs err=%g" % (groups, err))
    if ok:
        print("KERNEL_OK")
</pallas_src>

<mosaic_0001>
module attributes {stable_mosaic.version = 11 : i64} {
  func.func @_unit_kernel(%arg0: i32, %arg1: memref<1x16x16x128xf32, #tpu.memory_space<vmem>>, %arg2: memref<128x128xbf16, #tpu.memory_space<vmem>>, %arg3: memref<128x128xbf16, #tpu.memory_space<vmem>>, %arg4: memref<9x128xf32, #tpu.memory_space<vmem>>, %arg5: memref<2x128xf32, #tpu.memory_space<vmem>>, %arg6: memref<1x16x16x128xf32, #tpu.memory_space<vmem>>) attributes {dimension_semantics = [#tpu.dimension_semantics<parallel>], iteration_bounds = array<i64: 2>, scalar_prefetch = 0 : i64, scratch_operands = 0 : i64, tpu.core_type = #tpu.core_type<tc>, window_params = [{transform_indices = @transform_0, window_bounds = array<i64: 1, 16, 16, 128>}, {pipeline_mode = #tpu.pipeline_mode<synchronous>, transform_indices = @transform_1, window_bounds = array<i64: 128, 128>}, {pipeline_mode = #tpu.pipeline_mode<synchronous>, transform_indices = @transform_2, window_bounds = array<i64: 128, 128>}, {pipeline_mode = #tpu.pipeline_mode<synchronous>, transform_indices = @transform_3, window_bounds = array<i64: 9, 128>}, {pipeline_mode = #tpu.pipeline_mode<synchronous>, transform_indices = @transform_4, window_bounds = array<i64: 2, 128>}, {transform_indices = @transform_5, window_bounds = array<i64: 1, 16, 16, 128>}]} {
    %c0 = arith.constant 0 : index
    %c0_0 = arith.constant 0 : index
    %c0_1 = arith.constant 0 : index
    %c0_2 = arith.constant 0 : index
    %0 = vector.load %arg1[%c0, %c0_0, %c0_1, %c0_2] : memref<1x16x16x128xf32, #tpu.memory_space<vmem>>, vector<1x16x16x128xf32>
    %1 = vector.shape_cast %0 : vector<1x16x16x128xf32> to vector<256x128xf32>
    %2 = arith.truncf %1 : vector<256x128xf32> to vector<256x128xbf16>
    %c0_3 = arith.constant 0 : index
    %c0_4 = arith.constant 0 : index
    %3 = vector.load %arg2[%c0_3, %c0_4] : memref<128x128xbf16, #tpu.memory_space<vmem>>, vector<128x128xbf16>
    %cst = arith.constant dense<0.000000e+00> : vector<256x128xf32>
    %4 = tpu.matmul %2, %3, %cst {dimension_numbers = #tpu.dot_dimension_numbers<[1], [0], [0], [1], [0, 0, 1, 1], [], []>} : vector<256x128xbf16>, vector<128x128xbf16>, vector<256x128xf32> -> vector<256x128xf32>
    %c0_5 = arith.constant 0 : index
    %c0_6 = arith.constant 0 : index
    %5 = vector.load %arg5[%c0_5, %c0_6] : memref<2x128xf32, #tpu.memory_space<vmem>>, vector<1x128xf32>
    %6 = vector.broadcast %5 : vector<1x128xf32> to vector<256x128xf32>
    %7 = arith.addf %4, %6 : vector<256x128xf32>
    %cst_7 = arith.constant 0.000000e+00 : f32
    %8 = vector.broadcast %cst_7 : f32 to vector<256x128xf32>
    %9 = arith.maximumf %7, %8 : vector<256x128xf32>
    %10 = vector.shape_cast %9 : vector<256x128xf32> to vector<16x16x128xf32>
    %11 = tpu.iota {dimensions = array<i32: 1>} : vector<1x16x128xi32>
    %c1_i32 = arith.constant 1 : i32
    %12 = vector.broadcast %c1_i32 : i32 to vector<1x16x128xi32>
    %13 = arith.cmpi sge, %11, %12 : vector<1x16x128xi32>
    %cst_8 = arith.constant 1.000000e+00 : f32
    %cst_9 = arith.constant 0.000000e+00 : f32
    %14 = vector.broadcast %cst_8 : f32 to vector<1x16x128xf32>
    %15 = vector.broadcast %cst_9 : f32 to vector<1x16x128xf32>
    %16 = arith.select %13, %14, %15 : vector<1x16x128xi1>, vector<1x16x128xf32>
    %c14_i32 = arith.constant 14 : i32
    %17 = vector.broadcast %c14_i32 : i32 to vector<1x16x128xi32>
    %18 = arith.cmpi sle, %11, %17 : vector<1x16x128xi32>
    %cst_10 = arith.constant 1.000000e+00 : f32
    %cst_11 = arith.constant 0.000000e+00 : f32
    %19 = vector.broadcast %cst_10 : f32 to vector<1x16x128xf32>
    %20 = vector.broadcast %cst_11 : f32 to vector<1x16x128xf32>
    %21 = arith.select %18, %19, %20 : vector<1x16x128xi1>, vector<1x16x128xf32>
    %c1_i32_12 = arith.constant 1 : i32
    %22 = tpu.dynamic_rotate %10 by %c1_i32_12 dim 1 : vector<16x16x128xf32>, i32 -> vector<16x16x128xf32>
    %23 = vector.broadcast %16 : vector<1x16x128xf32> to vector<16x16x128xf32>
    %24 = arith.mulf %22, %23 : vector<16x16x128xf32>
    %25 = vector.shape_cast %24 : vector<16x16x128xf32> to vector<1x16x16x128xf32>
    %c15_i32 = arith.constant 15 : i32
    %26 = tpu.dynamic_rotate %10 by %c15_i32 dim 1 : vector<16x16x128xf32>, i32 -> vector<16x16x128xf32>
    %27 = vector.broadcast %21 : vector<1x16x128xf32> to vector<16x16x128xf32>
    %28 = arith.mulf %26, %27 : vector<16x16x128xf32>
    %29 = vector.shape_cast %28 : vector<16x16x128xf32> to vector<1x16x16x128xf32>
    %30 = vector.shape_cast %9 : vector<256x128xf32> to vector<1x16x16x128xf32>
    %c0_13 = arith.constant 0 : index
    %c0_14 = arith.constant 0 : index
    %31 = vector.load %arg4[%c0_13, %c0_14] : memref<9x128xf32, #tpu.memory_space<vmem>>, vector<9x128xf32>
    %cst_15 = arith.constant 0.000000e+00 : f32
    %32 = vector.broadcast %cst_15 : f32 to vector<1x1x16x128xf32>
    %33 = vector.extract_strided_slice %31 {offsets = [3, 0], sizes = [1, 128], strides = [1, 1]} : vector<9x128xf32> to vector<1x128xf32>
    %34 = vector.shape_cast %33 : vector<1x128xf32> to vector<1x1x1x128xf32>
    %35 = vector.broadcast %34 : vector<1x1x1x128xf32> to vector<1x16x16x128xf32>
    %36 = arith.mulf %25, %35 : vector<1x16x16x128xf32>
    %37 = vector.extract_strided_slice %31 {offsets = [4, 0], sizes = [1, 128], strides = [1, 1]} : vector<9x128xf32> to vector<1x128xf32>
    %38 = vector.shape_cast %37 : vector<1x128xf32> to vector<1x1x1x128xf32>
    %39 = vector.broadcast %38 : vector<1x1x1x128xf32> to vector<1x16x16x128xf32>
    %40 = arith.mulf %30, %39 : vector<1x16x16x128xf32>
    %41 = arith.addf %36, %40 : vector<1x16x16x128xf32>
    %42 = vector.extract_strided_slice %31 {offsets = [5, 0], sizes = [1, 128], strides = [1, 1]} : vector<9x128xf32> to vector<1x128xf32>
    %43 = vector.shape_cast %42 : vector<1x128xf32> to vector<1x1x1x128xf32>
    %44 = vector.broadcast %43 : vector<1x1x1x128xf32> to vector<1x16x16x128xf32>
    %45 = arith.mulf %29, %44 : vector<1x16x16x128xf32>
    %46 = arith.addf %41, %45 : vector<1x16x16x128xf32>
    %47 = vector.extract_strided_slice %31 {offsets = [0, 0], sizes = [1, 128], strides = [1, 1]} : vector<9x128xf32> to vector<1x128xf32>
    %48 = vector.shape_cast %47 : vector<1x128xf32> to vector<1x1x1x128xf32>
    %49 = vector.broadcast %48 : vector<1x1x1x128xf32> to vector<1x16x16x128xf32>
    %50 = arith.mulf %25, %49 : vector<1x16x16x128xf32>
    %51 = vector.extract_strided_slice %31 {offsets = [1, 0], sizes = [1, 128], strides = [1, 1]} : vector<9x128xf32> to vector<1x128xf32>
    %52 = vector.shape_cast %51 : vector<1x128xf32> to vector<1x1x1x128xf32>
    %53 = vector.broadcast %52 : vector<1x1x1x128xf32> to vector<1x16x16x128xf32>
    %54 = arith.mulf %30, %53 : vector<1x16x16x128xf32>
    %55 = arith.addf %50, %54 : vector<1x16x16x128xf32>
    %56 = vector.extract_strided_slice %31 {offsets = [2, 0], sizes = [1, 128], strides = [1, 1]} : vector<9x128xf32> to vector<1x128xf32>
    %57 = vector.shape_cast %56 : vector<1x128xf32> to vector<1x1x1x128xf32>
    %58 = vector.broadcast %57 : vector<1x1x1x128xf32> to vector<1x16x16x128xf32>
    %59 = arith.mulf %29, %58 : vector<1x16x16x128xf32>
    %60 = arith.addf %55, %59 : vector<1x16x16x128xf32>
    %61 = vector.extract_strided_slice %60 {offsets = [0, 0, 0, 0], sizes = [1, 15, 16, 128], strides = [1, 1, 1, 1]} : vector<1x16x16x128xf32> to vector<1x15x16x128xf32>
    %62 = tpu.concatenate %32, %61 in 1 : vector<1x1x16x128xf32>, vector<1x15x16x128xf32> -> vector<1x16x16x128xf32>
    %63 = arith.addf %46, %62 : vector<1x16x16x128xf32>
    %64 = vector.extract_strided_slice %31 {offsets = [6, 0], sizes = [1, 128], strides = [1, 1]} : vector<9x128xf32> to vector<1x128xf32>
    %65 = vector.shape_cast %64 : vector<1x128xf32> to vector<1x1x1x128xf32>
    %66 = vector.broadcast %65 : vector<1x1x1x128xf32> to vector<1x16x16x128xf32>
    %67 = arith.mulf %25, %66 : vector<1x16x16x128xf32>
    %68 = vector.extract_strided_slice %31 {offsets = [7, 0], sizes = [1, 128], strides = [1, 1]} : vector<9x128xf32> to vector<1x128xf32>
    %69 = vector.shape_cast %68 : vector<1x128xf32> to vector<1x1x1x128xf32>
    %70 = vector.broadcast %69 : vector<1x1x1x128xf32> to vector<1x16x16x128xf32>
    %71 = arith.mulf %30, %70 : vector<1x16x16x128xf32>
    %72 = arith.addf %67, %71 : vector<1x16x16x128xf32>
    %73 = vector.extract_strided_slice %31 {offsets = [8, 0], sizes = [1, 128], strides = [1, 1]} : vector<9x128xf32> to vector<1x128xf32>
    %74 = vector.shape_cast %73 : vector<1x128xf32> to vector<1x1x1x128xf32>
    %75 = vector.broadcast %74 : vector<1x1x1x128xf32> to vector<1x16x16x128xf32>
    %76 = arith.mulf %29, %75 : vector<1x16x16x128xf32>
    %77 = arith.addf %72, %76 : vector<1x16x16x128xf32>
    %78 = vector.extract_strided_slice %77 {offsets = [0, 1, 0, 0], sizes = [1, 15, 16, 128], strides = [1, 1, 1, 1]} : vector<1x16x16x128xf32> to vector<1x15x16x128xf32>
    %79 = tpu.concatenate %78, %32 in 1 : vector<1x15x16x128xf32>, vector<1x1x16x128xf32> -> vector<1x16x16x128xf32>
    %80 = arith.addf %63, %79 : vector<1x16x16x128xf32>
    %81 = vector.shape_cast %80 : vector<1x16x16x128xf32> to vector<256x128xf32>
    %82 = arith.truncf %81 : vector<256x128xf32> to vector<256x128xbf16>
    %c0_16 = arith.constant 0 : index
    %c0_17 = arith.constant 0 : index
    %83 = vector.load %arg3[%c0_16, %c0_17] : memref<128x128xbf16, #tpu.memory_space<vmem>>, vector<128x128xbf16>
    %cst_18 = arith.constant dense<0.000000e+00> : vector<256x128xf32>
    %84 = tpu.matmul %82, %83, %cst_18 {dimension_numbers = #tpu.dot_dimension_numbers<[1], [0], [0], [1], [0, 0, 1, 1], [], []>} : vector<256x128xbf16>, vector<128x128xbf16>, vector<256x128xf32> -> vector<256x128xf32>
    %c1 = arith.constant 1 : index
    %c0_19 = arith.constant 0 : index
    %85 = vector.load %arg5[%c1, %c0_19] : memref<2x128xf32, #tpu.memory_space<vmem>>, vector<1x128xf32>
    %86 = vector.broadcast %85 : vector<1x128xf32> to vector<256x128xf32>
    %87 = arith.addf %84, %86 : vector<256x128xf32>
    %cst_20 = arith.constant 0.000000e+00 : f32
    %88 = vector.broadcast %cst_20 : f32 to vector<256x128xf32>
    %89 = arith.maximumf %87, %88 : vector<256x128xf32>
    %c0_21 = arith.constant 0 : index
    %c0_22 = arith.constant 0 : index
    %c0_23 = arith.constant 0 : index
    %c0_24 = arith.constant 0 : index
    %90 = vector.load %arg1[%c0_21, %c0_22, %c0_23, %c0_24] : memref<1x16x16x128xf32, #tpu.memory_space<vmem>>, vector<1x16x16x128xf32>
    %91 = vector.shape_cast %90 : vector<1x16x16x128xf32> to vector<256x128xf32>
    %92 = arith.addf %91, %89 : vector<256x128xf32>
    %cst_25 = arith.constant 0.000000e+00 : f32
    %93 = vector.broadcast %cst_25 : f32 to vector<256x128xf32>
    %94 = arith.maximumf %92, %93 : vector<256x128xf32>
    %95 = vector.shape_cast %94 : vector<256x128xf32> to vector<1x16x16x128xf32>
    %c0_26 = arith.constant 0 : index
    %c0_27 = arith.constant 0 : index
    %c0_28 = arith.constant 0 : index
    %c0_29 = arith.constant 0 : index
    %96 = vector.load %arg6[%c0_26, %c0_27, %c0_28, %c0_29] : memref<1x16x16x128xf32, #tpu.memory_space<vmem>>, vector<1x16x16x128xf32>
    tpu.vector_store %arg6[%c0_26, %c0_27, %c0_28, %c0_29], %95 {strides = array<i32>} : memref<1x16x16x128xf32, #tpu.memory_space<vmem>>, vector<1x16x16x128xf32>,
    return
  }
  func.func @transform_0(%arg0: i32) -> (i32, i32, i32, i32) {
    %c0_i32 = arith.constant 0 : i32
    %c0_i32_0 = arith.constant 0 : i32
    %c0_i32_1 = arith.constant 0 : i32
    %c0_i32_2 = arith.constant 0 : i32
    return %arg0, %c0_i32, %c0_i32_0, %c0_i32_1 : i32, i32, i32, i32
  }
  func.func @transform_1(%arg0: i32) -> (i32, i32) {
    %c0_i32 = arith.constant 0 : i32
    %c0_i32_0 = arith.constant 0 : i32
    %c0_i32_1 = arith.constant 0 : i32
    return %c0_i32, %c0_i32_0 : i32, i32
  }
  func.func @transform_2(%arg0: i32) -> (i32, i32) {
    %c0_i32 = arith.constant 0 : i32
    %c0_i32_0 = arith.constant 0 : i32
    %c0_i32_1 = arith.constant 0 : i32
    return %c0_i32, %c0_i32_0 : i32, i32
  }
  func.func @transform_3(%arg0: i32) -> (i32, i32) {
    %c0_i32 = arith.constant 0 : i32
    %c0_i32_0 = arith.constant 0 : i32
    %c0_i32_1 = arith.constant 0 : i32
    return %c0_i32, %c0_i32_0 : i32, i32
  }
  func.func @transform_4(%arg0: i32) -> (i32, i32) {
    %c0_i32 = arith.constant 0 : i32
    %c0_i32_0 = arith.constant 0 : i32
    %c0_i32_1 = arith.constant 0 : i32
    return %c0_i32, %c0_i32_0 : i32, i32
  }
  func.func @transform_5(%arg0: i32) -> (i32, i32, i32, i32) {
    %c0_i32 = arith.constant 0 : i32
    %c0_i32_0 = arith.constant 0 : i32
    %c0_i32_1 = arith.constant 0 : i32
    %c0_i32_2 = arith.constant 0 : i32
    return %arg0, %c0_i32, %c0_i32_0, %c0_i32_1 : i32, i32, i32, i32
  }
}

</mosaic_0001>

<llo_original>
// kernel: tpu_custom_call.1
$region0: #{tpu_custom_call.1}
  #allocation0 [shape = 'u32[]', space=smem, size = 0x4, offset = 0x4, fixed_abs, tag = 'smem constant byte address 0x4 - core index']
  #allocation1 [shape = 'u32[144,128]{1,0:T(1,128)}', space=vmem, size = 0x12000, scoped, tag = 'internal scratch']
  %s0 = inlined_call_operand.hbm [shape: f32[2,16,16,128], index: 0, kind: input, shape index: {}]
  %s1 = inlined_call_operand.hbm [shape: bf16[128,128], index: 1, kind: input, shape index: {}]
  %s2 = inlined_call_operand.hbm [shape: bf16[128,128], index: 2, kind: input, shape index: {}]
  %s3 = inlined_call_operand.hbm [shape: f32[9,128], index: 3, kind: input, shape index: {}]
  %s4 = inlined_call_operand.vmem [shape: f32[2,128], index: 4, kind: input, shape index: {}]
  %s5 = inlined_call_operand.hbm [shape: f32[2,16,16,128], index: 5, kind: output, shape index: {}]
  %s6 = sld [smem:[#allocation0]]
  $region69: #{tpu_custom_call.1} parent=0
    _
  %s8 = ssub.s32 1, %s6
  %s9 = scalar_select 0, %s8, %s6
  $region1: #{tpu_custom_call.1} parent=0
    #allocation2 [shape = 'u8[262144]{0}', space=vmem, size = 0x40000, scoped, tag = 'input window, operand 0']
    #allocation3 [shape = 's32[2]{0}', space=sflag, size = 0x8, scoped, tag = 'scoped memory for tpu_custom_call.1']
    #allocation4 [shape = 's32[2]{0}', space=sflag, size = 0x8, scoped, tag = 'scoped memory for tpu_custom_call.1']
    #allocation5 [shape = 'u8[32768]{0}', space=vmem, size = 0x8000, scoped, tag = 'input window, operand 1, single buffered']
    #allocation6 [shape = 's32[1]{0}', space=sflag, size = 0x4, scoped, tag = 'scoped memory for tpu_custom_call.1']
    #allocation7 [shape = 'u8[32768]{0}', space=vmem, size = 0x8000, scoped, tag = 'input window, operand 2, single buffered']
    #allocation8 [shape = 'u8[8192]{0}', space=vmem, size = 0x2000, scoped, tag = 'input window, operand 3, single buffered']
    #allocation9 [shape = 's32[1]{0}', space=sflag, size = 0x4, scoped, tag = 'scoped memory for tpu_custom_call.1']
    #allocation10 [shape = 'u8[262144]{0}', space=vmem, size = 0x40000, scoped, tag = 'output window, operand 0']
    %10 = vsyncpa [#allocation3], 0
    %s11 = scalar_lea.sflag [#allocation3], 1
    %12 = vsyncpa %s11, 0
    %13 = vsyncpa [#allocation6], 0
    %14 = vsyncpa [#allocation9], 0
    %15 = vsyncpa [#allocation4], 0
    %s16 = scalar_lea.sflag [#allocation4], 1
    %17 = vsyncpa %s16, 0
    loop: start=0, step=1, limit=4
    $region2: #{tpu_custom_call.1} parent=1 // loop_pre_header
      _
    $region3: #{tpu_custom_call.1} parent=1 // loop_header
      %s19 = sphi 0, %s23
      %p20 = scmp.ge.s32.totalorder %s19, 4
      %s29 = sphi 0, %s31
      %s32 = sphi 0, %s29
      %s33 = sphi 0, %s32
      %s49 = sphi 0, %s33
      %s53 = sphi 0, %s53
      %s55 = sphi 0, %s53
      %s56 = sphi 0, %s55
      %s70 = sphi 0, %s56
      %s74 = sphi 0, %s74
      %s76 = sphi 0, %s74
      %s77 = sphi 0, %s76
      %s91 = sphi 0, %s77
      %s95 = sphi 0, %s95
      %s97 = sphi 0, %s95
      %s98 = sphi 0, %s97
      %s112 = sphi 0, %s98
      %s116 = sphi 0, %s116
      %s118 = sphi 0, %s116
      %s119 = sphi 0, %s118
      %s133 = sphi 0, %s119
      %s139 = sphi 0, %s141
      %s142 = sphi 0, %s139
      %s143 = sphi 0, %s142
      %s159 = sphi 0, %s143
    $region4: #{tpu_custom_call.1} parent=1 // loop_header_branch
      %22 = sbr.rel (%p20) target = $region8
    $region5: #{tpu_custom_call.1} parent=1 // loop_body
      %s24 = ssub.s32 %s19, 1
      %s25 = ssub.s32 %s19, 2
      %s26 = sadd.s32 %s19, 1
      %s27 = ssub.s32 %s19, %s26
      %p28 = scmp.eq.s32.totalorder %s27, 0
      %s30 = sadd.s32 %s29, 1
      %s31 = scalar_select %p28, %s29, %s30
      %p34 = pneg %p28
      %p35 = scmp.eq.s32.totalorder %s19, 1
      %p36 = por %p34, %p35
      %p37 = scmp.ne.s32.totalorder %s29, %s32
      %p38 = scmp.eq.s32.totalorder %s19, 0
      %p39 = por %p37, %p38
      %p40 = scmp.ne.s32.totalorder %s29, %s32
      %p41 = scmp.eq.s32.totalorder %s24, 1
      %p42 = por %p40, %p41
      %p43 = scmp.ne.s32.totalorder %s32, %s33
      %p44 = scmp.eq.s32.totalorder %s24, 0
      %p45 = por %p43, %p44
      %p46 = scmp.ne.s32.totalorder %s32, %s33
      %p47 = scmp.eq.s32.totalorder %s25, 1
      %p48 = por %p46, %p47
      %p50 = scmp.ne.s32.totalorder %s33, %s49
      %p51 = scmp.eq.s32.totalorder %s25, 0
      %p52 = por %p50, %p51
      %s54 = sadd.s32 %s53, 1
      %p57 = scmp.eq.s32.totalorder %s19, 1
      %p58 = scmp.ne.s32.totalorder %s53, %s55
      %p59 = scmp.eq.s32.totalorder %s19, 0
      %p60 = por %p58, %p59
      %p61 = scmp.ne.s32.totalorder %s53, %s55
      %p62 = scmp.eq.s32.totalorder %s24, 1
      %p63 = por %p61, %p62
      %p64 = scmp.ne.s32.totalorder %s55, %s56
      %p65 = scmp.eq.s32.totalorder %s24, 0
      %p66 = por %p64, %p65
      %p67 = scmp.ne.s32.totalorder %s55, %s56
      %p68 = scmp.eq.s32.totalorder %s25, 1
      %p69 = por %p67, %p68
      %p71 = scmp.ne.s32.totalorder %s56, %s70
      %p72 = scmp.eq.s32.totalorder %s25, 0
      %p73 = por %p71, %p72
      %s75 = sadd.s32 %s74, 1
      %p78 = scmp.eq.s32.totalorder %s19, 1
      %p79 = scmp.ne.s32.totalorder %s74, %s76
      %p80 = scmp.eq.s32.totalorder %s19, 0
      %p81 = por %p79, %p80
      %p82 = scmp.ne.s32.totalorder %s74, %s76
      %p83 = scmp.eq.s32.totalorder %s24, 1
      %p84 = por %p82, %p83
      %p85 = scmp.ne.s32.totalorder %s76, %s77
      %p86 = scmp.eq.s32.totalorder %s24, 0
      %p87 = por %p85, %p86
      %p88 = scmp.ne.s32.totalorder %s76, %s77
      %p89 = scmp.eq.s32.totalorder %s25, 1
      %p90 = por %p88, %p89
      %p92 = scmp.ne.s32.totalorder %s77, %s91
      %p93 = scmp.eq.s32.totalorder %s25, 0
      %p94 = por %p92, %p93
      %s96 = sadd.s32 %s95, 1
      %p99 = scmp.eq.s32.totalorder %s19, 1
      %p100 = scmp.ne.s32.totalorder %s95, %s97
      %p101 = scmp.eq.s32.totalorder %s19, 0
      %p102 = por %p100, %p101
      %p103 = scmp.ne.s32.totalorder %s95, %s97
      %p104 = scmp.eq.s32.totalorder %s24, 1
      %p105 = por %p103, %p104
      %p106 = scmp.ne.s32.totalorder %s97, %s98
      %p107 = scmp.eq.s32.totalorder %s24, 0
      %p108 = por %p106, %p107
      %p109 = scmp.ne.s32.totalorder %s97, %s98
      %p110 = scmp.eq.s32.totalorder %s25, 1
      %p111 = por %p109, %p110
      %p113 = scmp.ne.s32.totalorder %s98, %s112
      %p114 = scmp.eq.s32.totalorder %s25, 0
      %p115 = por %p113, %p114
      %s117 = sadd.s32 %s116, 1
      %p120 = scmp.eq.s32.totalorder %s19, 1
      %p121 = scmp.ne.s32.totalorder %s116, %s118
      %p122 = scmp.eq.s32.totalorder %s19, 0
      %p123 = por %p121, %p122
      %p124 = scmp.ne.s32.totalorder %s116, %s118
      %p125 = scmp.eq.s32.totalorder %s24, 1
      %p126 = por %p124, %p125
      %p127 = scmp.ne.s32.totalorder %s118, %s119
      %p128 = scmp.eq.s32.totalorder %s24, 0
      %p129 = por %p127, %p128
      %p130 = scmp.ne.s32.totalorder %s118, %s119
      %p131 = scmp.eq.s32.totalorder %s25, 1
      %p132 = por %p130, %p131
      %p134 = scmp.ne.s32.totalorder %s119, %s133
      %p135 = scmp.eq.s32.totalorder %s25, 0
      %p136 = por %p134, %p135
      %s137 = ssub.s32 %s19, %s26
      %p138 = scmp.eq.s32.totalorder %s137, 0
      %s140 = sadd.s32 %s139, 1
      %s141 = scalar_select %p138, %s139, %s140
      %p144 = pneg %p138
      %p145 = scmp.eq.s32.totalorder %s19, 1
      %p146 = por %p144, %p145
      %p147 = scmp.ne.s32.totalorder %s139, %s142
      %p148 = scmp.eq.s32.totalorder %s19, 0
      %p149 = por %p147, %p148
      %p150 = scmp.ne.s32.totalorder %s139, %s142
      %p151 = scmp.eq.s32.totalorder %s24, 1
      %p152 = por %p150, %p151
      %p153 = scmp.ne.s32.totalorder %s142, %s143
      %p154 = scmp.eq.s32.totalorder %s24, 0
      %p155 = por %p153, %p154
      %p156 = scmp.ne.s32.totalorder %s142, %s143
      %p157 = scmp.eq.s32.totalorder %s25, 1
      %p158 = por %p156, %p157
      %p160 = scmp.ne.s32.totalorder %s143, %s159
      %p161 = scmp.eq.s32.totalorder %s25, 0
      %p162 = por %p160, %p161
      %p163 = scmp.le.s32.totalorder 1, %s19
      %p164 = scmp.lt.s32.totalorder %s19, 3
      %p165 = pnand %p163, %p164
      %p166 = pneg %p165
      // Predicated region
      $region9: #{tpu_custom_call.1} parent=5 // pred_check
        _
      $region10: #{tpu_custom_call.1} parent=5 // pred_check_branch
        %168 = sbr.rel (%p165) target = $region12
      $region11: #{tpu_custom_call.1} parent=5 // pred_region
        %s169 = ssub.s32 %s19, 1
        // Predicated region
        $region13: #{tpu_custom_call.1} parent=11 // pred_check
          %p170 = pneg %p66
        $region14: #{tpu_custom_call.1} parent=11 // pred_check_branch
          %172 = sbr.rel (%p170) target = $region16
        $region15: #{tpu_custom_call.1} parent=11 // pred_region
          %s174 = ssub.s32 1024, 1024
          %175 = vsyncadd [#allocation6], %s174
          %s176 = sshll.u32 [#allocation5], 4
          %s177 = int_to_ptr.vmem [resolvable:$true] %s176
          %182 = dma.hbm_to_vmem [thread:$0]  %s1, 1024, %s177, [#allocation6], 64, 64, 4
        $region16: #{tpu_custom_call.1} parent=11 // pred_fallthru
          _
        // Predicated region
        $region17: #{tpu_custom_call.1} parent=11 // pred_check
          %p183 = pneg %p87
        $region18: #{tpu_custom_call.1} parent=11 // pred_check_branch
          %185 = sbr.rel (%p183) target = $region20
        $region19: #{tpu_custom_call.1} parent=11 // pred_region
          %s187 = ssub.s32 1024, 1024
          %188 = vsyncadd [#allocation6], %s187
          %s189 = sshll.u32 [#allocation7], 4
          %s190 = int_to_ptr.vmem [resolvable:$true] %s189
          %195 = dma.hbm_to_vmem [thread:$0]  %s2, 1024, %s190, [#allocation6], 64, 64, 4
        $region20: #{tpu_custom_call.1} parent=11 // pred_fallthru
          _
        // Predicated region
        $region21: #{tpu_custom_call.1} parent=11 // pred_check
          %p196 = pneg %p108
        $region22: #{tpu_custom_call.1} parent=11 // pred_check_branch
          %198 = sbr.rel (%p196) target = $region24
        $region23: #{tpu_custom_call.1} parent=11 // pred_region
          %s200 = ssub.s32 256, 256
          %201 = vsyncadd [#allocation9], %s200
          %s202 = sshll.u32 [#allocation8], 4
          %s203 = int_to_ptr.vmem [resolvable:$true] %s202
          %208 = dma.hbm_to_vmem [thread:$0]  %s3, 256, %s203, [#allocation9], 128, 128, 8
        $region24: #{tpu_custom_call.1} parent=11 // pred_fallthru
          _
        // Predicated region
        $region25: #{tpu_custom_call.1} parent=11 // pred_check
          %p209 = pneg %p129
        $region26: #{tpu_custom_call.1} parent=11 // pred_check_branch
          %211 = sbr.rel (%p209) target = $region28
        $region27: #{tpu_custom_call.1} parent=11 // pred_region
          _
        $region28: #{tpu_custom_call.1} parent=11 // pred_fallthru
          _
      $region12: #{tpu_custom_call.1} parent=5 // pred_fallthru
        _
      %p212 = scmp.lt.s32.totalorder %s19, 2
      // Predicated region
      $region29: #{tpu_custom_call.1} parent=5 // pred_check
        %p213 = pneg %p212
      $region30: #{tpu_custom_call.1} parent=5 // pred_check_branch
        %215 = sbr.rel (%p213) target = $region32
      $region31: #{tpu_custom_call.1} parent=5 // pred_region
        // Predicated region
        $region33: #{tpu_custom_call.1} parent=31 // pred_check
          %p216 = pneg %p39
        $region34: #{tpu_custom_call.1} parent=31 // pred_check_branch
          %218 = sbr.rel (%p216) target = $region36
        $region35: #{tpu_custom_call.1} parent=31 // pred_region
          %s219 = sand.u32 %s29, 1
          %s220 = scalar_lea.sflag [#allocation3], %s219
          %s221 = sand.u32 %s29, 1
          %s222 = smul.addr %s221, 256
          %s223 = scalar_lea.vmem [#allocation2], %s222
          %s225 = ssub.s32 4096, 4096
          %226 = vsyncadd %s220, %s225
          %s227 = smul.addr %s19, 32
          %s228 = smul.addr %s227, 128
          %s229 = scalar_lea.hbm %s0, %s228
          %s230 = sshll.u32 %s223, 4
          %s231 = int_to_ptr.vmem [resolvable:$true] %s230
          %236 = dma.hbm_to_vmem [thread:$0]  %s229, 4096, %s231, %s220, 128, 128, 8
        $region36: #{tpu_custom_call.1} parent=31 // pred_fallthru
          _
      $region32: #{tpu_custom_call.1} parent=5 // pred_fallthru
        _
      %p237 = scmp.le.s32.totalorder 1, %s19
      %p238 = scmp.lt.s32.totalorder %s19, 3
      %p239 = pnand %p237, %p238
      %p240 = pneg %p239
      // Predicated region
      $region37: #{tpu_custom_call.1} parent=5 // pred_check
        _
      $region38: #{tpu_custom_call.1} parent=5 // pred_check_branch
        %242 = sbr.rel (%p239) target = $region40
      $region39: #{tpu_custom_call.1} parent=5 // pred_region
        %s243 = ssub.s32 %s19, 1
        %s244 = sand.u32 %s32, 1
        %s245 = scalar_lea.sflag [#allocation3], %s244
        %s246 = sand.u32 %s32, 1
        %s247 = smul.addr %s246, 256
        %s248 = scalar_lea.vmem [#allocation2], %s247
        // Predicated region
        $region41: #{tpu_custom_call.1} parent=39 // pred_check
          %p249 = pneg %p45
        $region42: #{tpu_custom_call.1} parent=39 // pred_check_branch
          %251 = sbr.rel (%p249) target = $region44
        $region43: #{tpu_custom_call.1} parent=39 // pred_region
          %252 = dma.done %s245, 4096
        $region44: #{tpu_custom_call.1} parent=39 // pred_fallthru
          _
        // Predicated region
        $region45: #{tpu_custom_call.1} parent=39 // pred_check
          %p253 = pneg %p66
        $region46: #{tpu_custom_call.1} parent=39 // pred_check_branch
          %255 = sbr.rel (%p253) target = $region48
        $region47: #{tpu_custom_call.1} parent=39 // pred_region
          %256 = dma.done [#allocation6], 1024
        $region48: #{tpu_custom_call.1} parent=39 // pred_fallthru
          _
        // Predicated region
        $region49: #{tpu_custom_call.1} parent=39 // pred_check
          %p257 = pneg %p87
        $region50: #{tpu_custom_call.1} parent=39 // pred_check_branch
          %259 = sbr.rel (%p257) target = $region52
        $region51: #{tpu_custom_call.1} parent=39 // pred_region
          %260 = dma.done [#allocation6], 1024
        $region52: #{tpu_custom_call.1} parent=39 // pred_fallthru
          _
        // Predicated region
        $region53: #{tpu_custom_call.1} parent=39 // pred_check
          %p261 = pneg %p108
        $region54: #{tpu_custom_call.1} parent=39 // pred_check_branch
          %263 = sbr.rel (%p261) target = $region56
        $region55: #{tpu_custom_call.1} parent=39 // pred_region
          %264 = dma.done [#allocation9], 256
        $region56: #{tpu_custom_call.1} parent=39 // pred_fallthru
          _
        %s265 = sand.u32 %s32, 1
        %s266 = scalar_lea.sflag [#allocation3], %s265
        %s267 = sand.u32 %s32, 1
        %s268 = smul.addr %s267, 256
        %s269 = scalar_lea.vmem [#allocation2], %s268
        %p270 = pneg %p45
        %p271 = pneg %p42
        %p272 = pneg %p66
        %p273 = pneg %p63
        %p274 = pneg %p87
        %p275 = pneg %p84
        %p276 = pneg %p108
        %p277 = pneg %p105
        %p278 = pneg %p129
        %p279 = pneg %p126
        %p280 = pneg %p155
        %p281 = pneg %p152
        %s282 = sand.u32 %s142, 1
        %s283 = scalar_lea.sflag [#allocation4], %s282
        %s284 = sand.u32 %s142, 1
        %s285 = smul.addr %s284, 256
        %s286 = scalar_lea.vmem [#allocation10], %s285
        %v288 = vld [vmem:[%s248] sm:$0xff]
        %v289 = vld [vmem:[%s248 + $0x8] sm:$0xff]
        %v290 = vld [vmem:[%s248 + $0x10] sm:$0xff]
        %v291 = vld [vmem:[%s248 + $0x18] sm:$0xff]
        %v292 = vld [vmem:[%s248 + $0x20] sm:$0xff]
        %v293 = vld [vmem:[%s248 + $0x28] sm:$0xff]
        %v294 = vld [vmem:[%s248 + $0x30] sm:$0xff]
        %v295 = vld [vmem:[%s248 + $0x38] sm:$0xff]
        %v296 = vld [vmem:[%s248 + $0x40] sm:$0xff]
        %v297 = vld [vmem:[%s248 + $0x48] sm:$0xff]
        %v298 = vld [vmem:[%s248 + $0x50] sm:$0xff]
        %v299 = vld [vmem:[%s248 + $0x58] sm:$0xff]
        %v300 = vld [vmem:[%s248 + $0x60] sm:$0xff]
        %v301 = vld [vmem:[%s248 + $0x68] sm:$0xff]
        %v302 = vld [vmem:[%s248 + $0x70] sm:$0xff]
        %v303 = vld [vmem:[%s248 + $0x78] sm:$0xff]
        %v304 = vld [vmem:[%s248 + $0x80] sm:$0xff]
        %v305 = vld [vmem:[%s248 + $0x88] sm:$0xff]
        %v306 = vld [vmem:[%s248 + $0x90] sm:$0xff]
        %v307 = vld [vmem:[%s248 + $0x98] sm:$0xff]
        %v308 = vld [vmem:[%s248 + $0xa0] sm:$0xff]
        %v309 = vld [vmem:[%s248 + $0xa8] sm:$0xff]
        %v310 = vld [vmem:[%s248 + $0xb0] sm:$0xff]
        %v311 = vld [vmem:[%s248 + $0xb8] sm:$0xff]
        %v312 = vld [vmem:[%s248 + $0xc0] sm:$0xff]
        %v313 = vld [vmem:[%s248 + $0xc8] sm:$0xff]
        %v314 = vld [vmem:[%s248 + $0xd0] sm:$0xff]
        %v315 = vld [vmem:[%s248 + $0xd8] sm:$0xff]
        %v316 = vld [vmem:[%s248 + $0xe0] sm:$0xff]
        %v317 = vld [vmem:[%s248 + $0xe8] sm:$0xff]
        %v318 = vld [vmem:[%s248 + $0xf0] sm:$0xff]
        %v319 = vld [vmem:[%s248 + $0xf8] sm:$0xff]
        %v320 = vpack.c.bf16 %v289, %v288
        %v321 = vpack.c.bf16 %v291, %v290
        %v322 = vpack.c.bf16 %v293, %v292
        %v323 = vpack.c.bf16 %v295, %v294
        %v324 = vpack.c.bf16 %v297, %v296
        %v325 = vpack.c.bf16 %v299, %v298
        %v326 = vpack.c.bf16 %v301, %v300
        %v327 = vpack.c.bf16 %v303, %v302
        %v328 = vpack.c.bf16 %v305, %v304
        %v329 = vpack.c.bf16 %v307, %v306
        %v330 = vpack.c.bf16 %v309, %v308
        %v331 = vpack.c.bf16 %v311, %v310
        %v332 = vpack.c.bf16 %v313, %v312
        %v333 = vpack.c.bf16 %v315, %v314
        %v334 = vpack.c.bf16 %v317, %v316
        %v335 = vpack.c.bf16 %v319, %v318
        %v336 = vld [vmem:[#allocation5] sm:$0xf]
        %v337 = vld [vmem:[#allocation5 + $0x4] sm:$0xf]
        %v338 = vld [vmem:[#allocation5 + $0x8] sm:$0xf]
        %v339 = vld [vmem:[#allocation5 + $0xc] sm:$0xf]
        %v340 = vld [vmem:[#allocation5 + $0x10] sm:$0xf]
        %v341 = vld [vmem:[#allocation5 + $0x14] sm:$0xf]
        %v342 = vld [vmem:[#allocation5 + $0x18] sm:$0xf]
        %v343 = vld [vmem:[#allocation5 + $0x1c] sm:$0xf]
        %v344 = vld [vmem:[#allocation5 + $0x20] sm:$0xf]
        %v345 = vld [vmem:[#allocation5 + $0x24] sm:$0xf]
        %v346 = vld [vmem:[#allocation5 + $0x28] sm:$0xf]
        %v347 = vld [vmem:[#allocation5 + $0x2c] sm:$0xf]
        %v348 = vld [vmem:[#allocation5 + $0x30] sm:$0xf]
        %v349 = vld [vmem:[#allocation5 + $0x34] sm:$0xf]
        %v350 = vld [vmem:[#allocation5 + $0x38] sm:$0xf]
        %v351 = vld [vmem:[#allocation5 + $0x3c] sm:$0xf]
        %v352 = vld [vmem:[%s4] sm:$0x1]
        %v353 = vlaneseq
        %v354 = vshrl.u32 %v353, 7
        %v355 = vsub.s32 0, %v354
        %v356 = vrot.slane %v352, %v355
        %v373 = vunpack.c.l.b16 %v336
        %v374 = vunpack.c.l.b16 %v337
        %v375 = vunpack.c.l.b16 %v338
        %v376 = vunpack.c.l.b16 %v339
        %v377 = vunpack.c.l.b16 %v340
        %v378 = vunpack.c.l.b16 %v341
        %v379 = vunpack.c.l.b16 %v342
        %v380 = vunpack.c.l.b16 %v343
        %v381 = vunpack.c.l.b16 %v344
        %v382 = vunpack.c.l.b16 %v345
        %v383 = vunpack.c.l.b16 %v346
        %v384 = vunpack.c.l.b16 %v347
        %v385 = vunpack.c.l.b16 %v348
        %v386 = vunpack.c.l.b16 %v349
        %v387 = vunpack.c.l.b16 %v350
        %v388 = vunpack.c.l.b16 %v351
        %v389 = vpack.c.b16 %v374, %v373
        %v390 = vpack.c.b16 %v376, %v375
        %v391 = vpack.c.b16 %v378, %v377
        %v392 = vpack.c.b16 %v380, %v379
        %v393 = vpack.c.b16 %v382, %v381
        %v394 = vpack.c.b16 %v384, %v383
        %v395 = vpack.c.b16 %v386, %v385
        %v396 = vpack.c.b16 %v388, %v387
        %405 = vmatprep.subr.bf16.mxu0 0
        %406 = vmatpush1.bf16.msra.mxu0 %v396
        %407 = vmatprep.subr.bf16.mxu0 0
        %408 = vmatpush1.bf16.msra.mxu0 %v395
        %409 = vmatprep.subr.bf16.mxu0 0
        %410 = vmatpush1.bf16.msra.mxu0 %v394
        %411 = vmatprep.subr.bf16.mxu0 0
        %412 = vmatpush1.bf16.msra.mxu0 %v393
        %413 = vmatprep.subr.bf16.mxu0 0
        %414 = vmatpush1.bf16.msra.mxu0 %v392
        %415 = vmatprep.subr.bf16.mxu0 0
        %416 = vmatpush1.bf16.msra.mxu0 %v391
        %417 = vmatprep.subr.bf16.mxu0 0
        %418 = vmatpush1.bf16.msra.mxu0 %v390
        %419 = vmatprep.subr.bf16.mxu0 0
        %420 = vmatpush1.bf16.msra.mxu0 %v389
        %421 = vmatprep.subr.bf16.mxu0 0
        %422 = vmatpush2.bf16.msra.mxu0 0
        %423 = vmatprep.subr.bf16.mxu0 0
        %424 = vmatpush2.bf16.msra.mxu0 0
        %425 = vmatprep.subr.bf16.mxu0 0
        %426 = vmatpush2.bf16.msra.mxu0 0
        %427 = vmatprep.subr.bf16.mxu0 0
        %428 = vmatpush2.bf16.msra.mxu0 0
        %429 = vmatprep.subr.bf16.mxu0 0
        %430 = vmatpush2.bf16.msra.mxu0 0
        %431 = vmatprep.subr.bf16.mxu0 0
        %432 = vmatpush2.bf16.msra.mxu0 0
        %433 = vmatprep.subr.bf16.mxu0 0
        %434 = vmatpush2.bf16.msra.mxu0 0
        %435 = vmatprep.subr.bf16.mxu0 0
        %436 = vmatpush2.bf16.msra.mxu0 0
        %437 = vmatprep.mubr.bf16.mxu0 0
        %438 = vmatmul.mubr.bf16.gmra.mxu0 %v320
        %v439 = vpop.f32.mrf.mxu0
        %v440 = vadd.f32 %v356, %v439
        %v441 = vpop.f32.mrf.mxu0
        %v442 = vpop.f32.mrf.mxu0
        %v443 = vadd.f32 %v356, %v442
        %v444 = vpop.f32.mrf.mxu0
        %445 = vmatprep.mubr.bf16.mxu0 0
        %446 = vmatmul.mubr.bf16.gmra.mxu0 %v321
        %v447 = vpop.f32.mrf.mxu0
        %v448 = vadd.f32 %v356, %v447
        %v449 = vpop.f32.mrf.mxu0
        %v450 = vpop.f32.mrf.mxu0
        %v451 = vadd.f32 %v356, %v450
        %v452 = vpop.f32.mrf.mxu0
        %453 = vmatprep.mubr.bf16.mxu0 0
        %454 = vmatmul.mubr.bf16.gmra.mxu0 %v322
        %v455 = vpop.f32.mrf.mxu0
        %v456 = vadd.f32 %v356, %v455
        %v457 = vpop.f32.mrf.mxu0
        %v458 = vpop.f32.mrf.mxu0
        %v459 = vadd.f32 %v356, %v458
        %v460 = vpop.f32.mrf.mxu0
        %461 = vmatprep.mubr.bf16.mxu0 0
        %462 = vmatmul.mubr.bf16.gmra.mxu0 %v323
        %v463 = vpop.f32.mrf.mxu0
        %v464 = vadd.f32 %v356, %v463
        %v465 = vpop.f32.mrf.mxu0
        %v466 = vpop.f32.mrf.mxu0
        %v467 = vadd.f32 %v356, %v466
        %v468 = vpop.f32.mrf.mxu0
        %469 = vmatprep.mubr.bf16.mxu0 0
        %470 = vmatmul.mubr.bf16.gmra.mxu0 %v324
        %v471 = vpop.f32.mrf.mxu0
        %v472 = vadd.f32 %v356, %v471
        %v473 = vpop.f32.mrf.mxu0
        %v474 = vpop.f32.mrf.mxu0
        %v475 = vadd.f32 %v356, %v474
        %v476 = vpop.f32.mrf.mxu0
        %477 = vmatprep.mubr.bf16.mxu0 0
        %478 = vmatmul.mubr.bf16.gmra.mxu0 %v325
        %v479 = vpop.f32.mrf.mxu0
        %v480 = vadd.f32 %v356, %v479
        %v481 = vpop.f32.mrf.mxu0
        %v482 = vpop.f32.mrf.mxu0
        %v483 = vadd.f32 %v356, %v482
        %v484 = vpop.f32.mrf.mxu0
        %485 = vmatprep.mubr.bf16.mxu0 0
        %486 = vmatmul.mubr.bf16.gmra.mxu0 %v326
        %v487 = vpop.f32.mrf.mxu0
        %v488 = vadd.f32 %v356, %v487
        %v489 = vpop.f32.mrf.mxu0
        %v490 = vpop.f32.mrf.mxu0
        %v491 = vadd.f32 %v356, %v490
        %v492 = vpop.f32.mrf.mxu0
        %493 = vmatprep.mubr.bf16.mxu0 0
        %494 = vmatmul.mubr.bf16.gmra.mxu0 %v327
        %v495 = vpop.f32.mrf.mxu0
        %v496 = vadd.f32 %v356, %v495
        %v497 = vpop.f32.mrf.mxu0
        %v498 = vpop.f32.mrf.mxu0
        %v499 = vadd.f32 %v356, %v498
        %v500 = vpop.f32.mrf.mxu0
        %501 = vmatprep.mubr.bf16.mxu0 0
        %502 = vmatmul.mubr.bf16.gmra.mxu0 %v328
        %v503 = vpop.f32.mrf.mxu0
        %v504 = vadd.f32 %v356, %v503
        %v505 = vpop.f32.mrf.mxu0
        %v506 = vpop.f32.mrf.mxu0
        %v507 = vadd.f32 %v356, %v506
        %v508 = vpop.f32.mrf.mxu0
        %509 = vmatprep.mubr.bf16.mxu0 0
        %510 = vmatmul.mubr.bf16.gmra.mxu0 %v329
        %v511 = vpop.f32.mrf.mxu0
        %v512 = vadd.f32 %v356, %v511
        %v513 = vpop.f32.mrf.mxu0
        %v514 = vpop.f32.mrf.mxu0
        %v515 = vadd.f32 %v356, %v514
        %v516 = vpop.f32.mrf.mxu0
        %517 = vmatprep.mubr.bf16.mxu0 0
        %518 = vmatmul.mubr.bf16.gmra.mxu0 %v330
        %v519 = vpop.f32.mrf.mxu0
        %v520 = vadd.f32 %v356, %v519
        %v521 = vpop.f32.mrf.mxu0
        %v522 = vpop.f32.mrf.mxu0
        %v523 = vadd.f32 %v356, %v522
        %v524 = vpop.f32.mrf.mxu0
        %525 = vmatprep.mubr.bf16.mxu0 0
        %526 = vmatmul.mubr.bf16.gmra.mxu0 %v331
        %v527 = vpop.f32.mrf.mxu0
        %v528 = vadd.f32 %v356, %v527
        %v529 = vpop.f32.mrf.mxu0
        %v530 = vpop.f32.mrf.mxu0
        %v531 = vadd.f32 %v356, %v530
        %v532 = vpop.f32.mrf.mxu0
        %533 = vmatprep.mubr.bf16.mxu0 0
        %534 = vmatmul.mubr.bf16.gmra.mxu0 %v332
        %v535 = vpop.f32.mrf.mxu0
        %v536 = vadd.f32 %v356, %v535
        %v537 = vpop.f32.mrf.mxu0
        %v538 = vpop.f32.mrf.mxu0
        %v539 = vadd.f32 %v356, %v538
        %v540 = vpop.f32.mrf.mxu0
        %541 = vmatprep.mubr.bf16.mxu0 0
        %542 = vmatmul.mubr.bf16.gmra.mxu0 %v333
        %v543 = vpop.f32.mrf.mxu0
        %v544 = vadd.f32 %v356, %v543
        %v545 = vpop.f32.mrf.mxu0
        %v546 = vpop.f32.mrf.mxu0
        %v547 = vadd.f32 %v356, %v546
        %v548 = vpop.f32.mrf.mxu0
        %549 = vmatprep.mubr.bf16.mxu0 0
        %550 = vmatmul.mubr.bf16.gmra.mxu0 %v334
        %v551 = vpop.f32.mrf.mxu0
        %v552 = vadd.f32 %v356, %v551
        %v553 = vpop.f32.mrf.mxu0
        %v554 = vpop.f32.mrf.mxu0
        %v555 = vadd.f32 %v356, %v554
        %v556 = vpop.f32.mrf.mxu0
        %557 = vmatprep.mubr.bf16.mxu0 0
        %558 = vmatmul.mubr.bf16.gmra.mxu0 %v335
        %v559 = vpop.f32.mrf.mxu0
        %v560 = vadd.f32 %v356, %v559
        %v561 = vpop.f32.mrf.mxu0
        %v562 = vpop.f32.mrf.mxu0
        %v563 = vadd.f32 %v356, %v562
        %v564 = vpop.f32.mrf.mxu0
        %565 = vdwg.mxu0
        %v566 = vmax.f32 %v440, 0.0
        %v567 = vmax.f32 %v443, 0.0
        %v568 = vmax.f32 %v448, 0.0
        %v569 = vmax.f32 %v451, 0.0
        %v570 = vmax.f32 %v456, 0.0
        %v571 = vmax.f32 %v459, 0.0
        %v572 = vmax.f32 %v464, 0.0
        %v573 = vmax.f32 %v467, 0.0
        %v574 = vmax.f32 %v472, 0.0
        %v575 = vmax.f32 %v475, 0.0
        %v576 = vmax.f32 %v480, 0.0
        %v577 = vmax.f32 %v483, 0.0
        %v578 = vmax.f32 %v488, 0.0
        %v579 = vmax.f32 %v491, 0.0
        %v580 = vmax.f32 %v496, 0.0
        %v581 = vmax.f32 %v499, 0.0
        %v582 = vmax.f32 %v504, 0.0
        %v583 = vmax.f32 %v507, 0.0
        %v584 = vmax.f32 %v512, 0.0
        %v585 = vmax.f32 %v515, 0.0
        %v586 = vmax.f32 %v520, 0.0
        %v587 = vmax.f32 %v523, 0.0
        %v588 = vmax.f32 %v528, 0.0
        %v589 = vmax.f32 %v531, 0.0
        %v590 = vmax.f32 %v536, 0.0
        %v591 = vmax.f32 %v539, 0.0
        %v592 = vmax.f32 %v544, 0.0
        %v593 = vmax.f32 %v547, 0.0
        %v594 = vmax.f32 %v552, 0.0
        %v595 = vmax.f32 %v555, 0.0
        %v596 = vmax.f32 %v560, 0.0
        %v597 = vmax.f32 %v563, 0.0
        %v598 = vlaneseq
        %v599 = vshrl.u32 %v598, 7
        %v600 = vadd.s32 %v599, 8
        %vm601 = vcmp.ge.s32.totalorder %v599, 1
        %vm602 = vcmp.ge.s32.totalorder %v600, 1
        %v603 = vsel %vm601, 1.0, 0.0
        %v604 = vsel %vm602, 1.0, 0.0
        %vm605 = vcmp.le.s32.totalorder %v599, 14
        %vm606 = vcmp.le.s32.totalorder %v600, 14
        %v607 = vsel %vm605, 1.0, 0.0
        %v608 = vsel %vm606, 1.0, 0.0
        %v609 = vrot.slane %v566, 7
        %v610 = vrot.slane %v568, 7
        %v611 = vrot.slane %v570, 7
        %v612 = vrot.slane %v572, 7
        %v613 = vrot.slane %v574, 7
        %v614 = vrot.slane %v576, 7
        %v615 = vrot.slane %v578, 7
        %v616 = vrot.slane %v580, 7
        %v617 = vrot.slane %v582, 7
        %v618 = vrot.slane %v584, 7
        %v619 = vrot.slane %v586, 7
        %v620 = vrot.slane %v588, 7
        %v621 = vrot.slane %v590, 7
        %v622 = vrot.slane %v592, 7
        %v623 = vrot.slane %v594, 7
        %v624 = vrot.slane %v596, 7
        %v625 = vrot.slane %v567, 7
        %v626 = vrot.slane %v569, 7
        %v627 = vrot.slane %v571, 7
        %v628 = vrot.slane %v573, 7
        %v629 = vrot.slane %v575, 7
        %v630 = vrot.slane %v577, 7
        %v631 = vrot.slane %v579, 7
        %v632 = vrot.slane %v581, 7
        %v633 = vrot.slane %v583, 7
        %v634 = vrot.slane %v585, 7
        %v635 = vrot.slane %v587, 7
        %v636 = vrot.slane %v589, 7
        %v637 = vrot.slane %v591, 7
        %v638 = vrot.slane %v593, 7
        %v639 = vrot.slane %v595, 7
        %v640 = vrot.slane %v597, 7
        %vm641 = vcmp.lt.s32.totalorder %v599, 1
        %v642 = vsel %vm641, %v609, %v625
        %v643 = vsel %vm641, %v610, %v626
        %v644 = vsel %vm641, %v611, %v627
        %v645 = vsel %vm641, %v612, %v628
        %v646 = vsel %vm641, %v613, %v629
        %v647 = vsel %vm641, %v614, %v630
        %v648 = vsel %vm641, %v615, %v631
        %v649 = vsel %vm641, %v616, %v632
        %v650 = vsel %vm641, %v617, %v633
        %v651 = vsel %vm641, %v618, %v634
        %v652 = vsel %vm641, %v619, %v635
        %v653 = vsel %vm641, %v620, %v636
        %v654 = vsel %vm641, %v621, %v637
        %v655 = vsel %vm641, %v622, %v638
        %v656 = vsel %vm641, %v623, %v639
        %v657 = vsel %vm641, %v624, %v640
        %v658 = vsel %vm641, %v625, %v609
        %v659 = vsel %vm641, %v626, %v610
        %v660 = vsel %vm641, %v627, %v611
        %v661 = vsel %vm641, %v628, %v612
        %v662 = vsel %vm641, %v629, %v613
        %v663 = vsel %vm641, %v630, %v614
        %v664 = vsel %vm641, %v631, %v615
        %v665 = vsel %vm641, %v632, %v616
        %v666 = vsel %vm641, %v633, %v617
        %v667 = vsel %vm641, %v634, %v618
        %v668 = vsel %vm641, %v635, %v619
        %v669 = vsel %vm641, %v636, %v620
        %v670 = vsel %vm641, %v637, %v621
        %v671 = vsel %vm641, %v638, %v622
        %v672 = vsel %vm641, %v639, %v623
        %v673 = vsel %vm641, %v640, %v624
        %v674 = vmul.f32 %v658, %v603
        %v675 = vmul.f32 %v642, %v604
        %v676 = vmul.f32 %v659, %v603
        %v677 = vmul.f32 %v643, %v604
        %v678 = vmul.f32 %v660, %v603
        %v679 = vmul.f32 %v644, %v604
        %v680 = vmul.f32 %v661, %v603
        %v681 = vmul.f32 %v645, %v604
        %v682 = vmul.f32 %v662, %v603
        %v683 = vmul.f32 %v646, %v604
        %v684 = vmul.f32 %v663, %v603
        %v685 = vmul.f32 %v647, %v604
        %v686 = vmul.f32 %v664, %v603
        %v687 = vmul.f32 %v648, %v604
        %v688 = vmul.f32 %v665, %v603
        %v689 = vmul.f32 %v649, %v604
        %v690 = vmul.f32 %v666, %v603
        %v691 = vmul.f32 %v650, %v604
        %v692 = vmul.f32 %v667, %v603
        %v693 = vmul.f32 %v651, %v604
        %v694 = vmul.f32 %v668, %v603
        %v695 = vmul.f32 %v652, %v604
        %v696 = vmul.f32 %v669, %v603
        %v697 = vmul.f32 %v653, %v604
        %v698 = vmul.f32 %v670, %v603
        %v699 = vmul.f32 %v654, %v604
        %v700 = vmul.f32 %v671, %v603
        %v701 = vmul.f32 %v655, %v604
        %v702 = vmul.f32 %v672, %v603
        %v703 = vmul.f32 %v656, %v604
        %v704 = vmul.f32 %v673, %v603
        %v705 = vmul.f32 %v657, %v604
        %v706 = vrot.slane %v566, 1
        %v707 = vrot.slane %v568, 1
        %v708 = vrot.slane %v570, 1
        %v709 = vrot.slane %v572, 1
        %v710 = vrot.slane %v574, 1
        %v711 = vrot.slane %v576, 1
        %v712 = vrot.slane %v578, 1
        %v713 = vrot.slane %v580, 1
        %v714 = vrot.slane %v582, 1
        %v715 = vrot.slane %v584, 1
        %v716 = vrot.slane %v586, 1
        %v717 = vrot.slane %v588, 1
        %v718 = vrot.slane %v590, 1
        %v719 = vrot.slane %v592, 1
        %v720 = vrot.slane %v594, 1
        %v721 = vrot.slane %v596, 1
        %v722 = vrot.slane %v567, 1
        %v723 = vrot.slane %v569, 1
        %v724 = vrot.slane %v571, 1
        %v725 = vrot.slane %v573, 1
        %v726 = vrot.slane %v575, 1
        %v727 = vrot.slane %v577, 1
        %v728 = vrot.slane %v579, 1
        %v729 = vrot.slane %v581, 1
        %v730 = vrot.slane %v583, 1
        %v731 = vrot.slane %v585, 1
        %v732 = vrot.slane %v587, 1
        %v733 = vrot.slane %v589, 1
        %v734 = vrot.slane %v591, 1
        %v735 = vrot.slane %v593, 1
        %v736 = vrot.slane %v595, 1
        %v737 = vrot.slane %v597, 1
        %vm738 = vcmp.lt.s32.totalorder %v599, 7
        %v739 = vsel %vm738, %v706, %v722
        %v740 = vsel %vm738, %v707, %v723
        %v741 = vsel %vm738, %v708, %v724
        %v742 = vsel %vm738, %v709, %v725
        %v743 = vsel %vm738, %v710, %v726
        %v744 = vsel %vm738, %v711, %v727
        %v745 = vsel %vm738, %v712, %v728
        %v746 = vsel %vm738, %v713, %v729
        %v747 = vsel %vm738, %v714, %v730
        %v748 = vsel %vm738, %v715, %v731
        %v749 = vsel %vm738, %v716, %v732
        %v750 = vsel %vm738, %v717, %v733
        %v751 = vsel %vm738, %v718, %v734
        %v752 = vsel %vm738, %v719, %v735
        %v753 = vsel %vm738, %v720, %v736
        %v754 = vsel %vm738, %v721, %v737
        %v755 = vsel %vm738, %v722, %v706
        %v756 = vsel %vm738, %v723, %v707
        %v757 = vsel %vm738, %v724, %v708
        %v758 = vsel %vm738, %v725, %v709
        %v759 = vsel %vm738, %v726, %v710
        %v760 = vsel %vm738, %v727, %v711
        %v761 = vsel %vm738, %v728, %v712
        %v762 = vsel %vm738, %v729, %v713
        %v763 = vsel %vm738, %v730, %v714
        %v764 = vsel %vm738, %v731, %v715
        %v765 = vsel %vm738, %v732, %v716
        %v766 = vsel %vm738, %v733, %v717
        %v767 = vsel %vm738, %v734, %v718
        %v768 = vsel %vm738, %v735, %v719
        %v769 = vsel %vm738, %v736, %v720
        %v770 = vsel %vm738, %v737, %v721
        %v771 = vmul.f32 %v739, %v607
        %v772 = vmul.f32 %v755, %v608
        %v773 = vmul.f32 %v740, %v607
        %v774 = vmul.f32 %v756, %v608
        %v775 = vmul.f32 %v741, %v607
        %v776 = vmul.f32 %v757, %v608
        %v777 = vmul.f32 %v742, %v607
        %v778 = vmul.f32 %v758, %v608
        %v779 = vmul.f32 %v743, %v607
        %v780 = vmul.f32 %v759, %v608
        %v781 = vmul.f32 %v744, %v607
        %v782 = vmul.f32 %v760, %v608
        %v783 = vmul.f32 %v745, %v607
        %v784 = vmul.f32 %v761, %v608
        %v785 = vmul.f32 %v746, %v607
        %v786 = vmul.f32 %v762, %v608
        %v787 = vmul.f32 %v747, %v607
        %v788 = vmul.f32 %v763, %v608
        %v789 = vmul.f32 %v748, %v607
        %v790 = vmul.f32 %v764, %v608
        %v791 = vmul.f32 %v749, %v607
        %v792 = vmul.f32 %v765, %v608
        %v793 = vmul.f32 %v750, %v607
        %v794 = vmul.f32 %v766, %v608
        %v795 = vmul.f32 %v751, %v607
        %v796 = vmul.f32 %v767, %v608
        %v797 = vmul.f32 %v752, %v607
        %v798 = vmul.f32 %v768, %v608
        %v799 = vmul.f32 %v753, %v607
        %v800 = vmul.f32 %v769, %v608
        %v801 = vmul.f32 %v754, %v607
        %v802 = vmul.f32 %v770, %v608
        %v803 = vld [vmem:[#allocation8] sm:$0xff]
        %v804 = vld [vmem:[#allocation8 + $0x8] sm:$0x1]
        %v805 = vlaneseq
        %v806 = vshrl.u32 %v805, 7
        %v807 = vsub.s32 3, %v806
        %v808 = vrot.slane %v803, %v807
        %v809 = vmul.f32 %v674, %v808
        %v810 = vmul.f32 %v675, %v808
        %v811 = vmul.f32 %v676, %v808
        %v812 = vmul.f32 %v677, %v808
        %v813 = vmul.f32 %v678, %v808
        %v814 = vmul.f32 %v679, %v808
        %v815 = vmul.f32 %v680, %v808
        %v816 = vmul.f32 %v681, %v808
        %v817 = vmul.f32 %v682, %v808
        %v818 = vmul.f32 %v683, %v808
        %v819 = vmul.f32 %v684, %v808
        %v820 = vmul.f32 %v685, %v808
        %v821 = vmul.f32 %v686, %v808
        %v822 = vmul.f32 %v687, %v808
        %v823 = vmul.f32 %v688, %v808
        %v824 = vmul.f32 %v689, %v808
        %v825 = vmul.f32 %v690, %v808
        %v826 = vmul.f32 %v691, %v808
        %v827 = vmul.f32 %v692, %v808
        %v828 = vmul.f32 %v693, %v808
        %v829 = vmul.f32 %v694, %v808
        %v830 = vmul.f32 %v695, %v808
        %v831 = vmul.f32 %v696, %v808
        %v832 = vmul.f32 %v697, %v808
        %v833 = vmul.f32 %v698, %v808
        %v834 = vmul.f32 %v699, %v808
        %v835 = vmul.f32 %v700, %v808
        %v836 = vmul.f32 %v701, %v808
        %v837 = vmul.f32 %v702, %v808
        %v838 = vmul.f32 %v703, %v808
        %v839 = vmul.f32 %v704, %v808
        %v840 = vmul.f32 %v705, %v808
        %v841 = vlaneseq
        %v842 = vshrl.u32 %v841, 7
        %v843 = vsub.s32 4, %v842
        %v844 = vrot.slane %v803, %v843
        %v845 = vmul.f32 %v566, %v844
        %v846 = vmul.f32 %v567, %v844
        %v847 = vmul.f32 %v568, %v844
        %v848 = vmul.f32 %v569, %v844
        %v849 = vmul.f32 %v570, %v844
        %v850 = vmul.f32 %v571, %v844
        %v851 = vmul.f32 %v572, %v844
        %v852 = vmul.f32 %v573, %v844
        %v853 = vmul.f32 %v574, %v844
        %v854 = vmul.f32 %v575, %v844
        %v855 = vmul.f32 %v576, %v844
        %v856 = vmul.f32 %v577, %v844
        %v857 = vmul.f32 %v578, %v844
        %v858 = vmul.f32 %v579, %v844
        %v859 = vmul.f32 %v580, %v844
        %v860 = vmul.f32 %v581, %v844
        %v861 = vmul.f32 %v582, %v844
        %v862 = vmul.f32 %v583, %v844
        %v863 = vmul.f32 %v584, %v844
        %v864 = vmul.f32 %v585, %v844
        %v865 = vmul.f32 %v586, %v844
        %v866 = vmul.f32 %v587, %v844
        %v867 = vmul.f32 %v588, %v844
        %v868 = vmul.f32 %v589, %v844
        %v869 = vmul.f32 %v590, %v844
        %v870 = vmul.f32 %v591, %v844
        %v871 = vmul.f32 %v592, %v844
        %v872 = vmul.f32 %v593, %v844
        %v873 = vmul.f32 %v594, %v844
        %v874 = vmul.f32 %v595, %v844
        %v875 = vmul.f32 %v596, %v844
        %v876 = vmul.f32 %v597, %v844
        %v877 = vadd.f32 %v809, %v845
        %v878 = vadd.f32 %v810, %v846
        %v879 = vadd.f32 %v811, %v847
        %v880 = vadd.f32 %v812, %v848
        %v881 = vadd.f32 %v813, %v849
        %v882 = vadd.f32 %v814, %v850
        %v883 = vadd.f32 %v815, %v851
        %v884 = vadd.f32 %v816, %v852
        %v885 = vadd.f32 %v817, %v853
        %v886 = vadd.f32 %v818, %v854
        %v887 = vadd.f32 %v819, %v855
        %v888 = vadd.f32 %v820, %v856
        %v889 = vadd.f32 %v821, %v857
        %v890 = vadd.f32 %v822, %v858
        %v891 = vadd.f32 %v823, %v859
        %v892 = vadd.f32 %v824, %v860
        %v893 = vadd.f32 %v825, %v861
        %v894 = vadd.f32 %v826, %v862
        %v895 = vadd.f32 %v827, %v863
        %v896 = vadd.f32 %v828, %v864
        %v897 = vadd.f32 %v829, %v865
        %v898 = vadd.f32 %v830, %v866
        %v899 = vadd.f32 %v831, %v867
        %v900 = vadd.f32 %v832, %v868
        %v901 = vadd.f32 %v833, %v869
        %v902 = vadd.f32 %v834, %v870
        %v903 = vadd.f32 %v835, %v871
        %v904 = vadd.f32 %v836, %v872
        %v905 = vadd.f32 %v837, %v873
        %v906 = vadd.f32 %v838, %v874
        %v907 = vadd.f32 %v839, %v875
        %v908 = vadd.f32 %v840, %v876
        %v909 = vlaneseq
        %v910 = vshrl.u32 %v909, 7
        %v911 = vsub.s32 5, %v910
        %v912 = vrot.slane %v803, %v911
        %v913 = vmul.f32 %v771, %v912
        %v914 = vmul.f32 %v772, %v912
        %v915 = vmul.f32 %v773, %v912
        %v916 = vmul.f32 %v774, %v912
        %v917 = vmul.f32 %v775, %v912
        %v918 = vmul.f32 %v776, %v912
        %v919 = vmul.f32 %v777, %v912
        %v920 = vmul.f32 %v778, %v912
        %v921 = vmul.f32 %v779, %v912
        %v922 = vmul.f32 %v780, %v912
        %v923 = vmul.f32 %v781, %v912
        %v924 = vmul.f32 %v782, %v912
        %v925 = vmul.f32 %v783, %v912
        %v926 = vmul.f32 %v784, %v912
        %v927 = vmul.f32 %v785, %v912
        %v928 = vmul.f32 %v786, %v912
        %v929 = vmul.f32 %v787, %v912
        %v930 = vmul.f32 %v788, %v912
        %v931 = vmul.f32 %v789, %v912
        %v932 = vmul.f32 %v790, %v912
        %v933 = vmul.f32 %v791, %v912
        %v934 = vmul.f32 %v792, %v912
        %v935 = vmul.f32 %v793, %v912
        %v936 = vmul.f32 %v794, %v912
        %v937 = vmul.f32 %v795, %v912
        %v938 = vmul.f32 %v796, %v912
        %v939 = vmul.f32 %v797, %v912
        %v940 = vmul.f32 %v798, %v912
        %v941 = vmul.f32 %v799, %v912
        %v942 = vmul.f32 %v800, %v912
        %v943 = vmul.f32 %v801, %v912
        %v944 = vmul.f32 %v802, %v912
        %v945 = vadd.f32 %v877, %v913
        %v946 = vadd.f32 %v878, %v914
        %v947 = vadd.f32 %v879, %v915
        %v948 = vadd.f32 %v880, %v916
        %v949 = vadd.f32 %v881, %v917
        %v950 = vadd.f32 %v882, %v918
        %v951 = vadd.f32 %v883, %v919
        %v952 = vadd.f32 %v884, %v920
        %v953 = vadd.f32 %v885, %v921
        %v954 = vadd.f32 %v886, %v922
        %v955 = vadd.f32 %v887, %v923
        %v956 = vadd.f32 %v888, %v924
        %v957 = vadd.f32 %v889, %v925
        %v958 = vadd.f32 %v890, %v926
        %v959 = vadd.f32 %v891, %v927
        %v960 = vadd.f32 %v892, %v928
        %v961 = vadd.f32 %v893, %v929
        %v962 = vadd.f32 %v894, %v930
        %v963 = vadd.f32 %v895, %v931
        %v964 = vadd.f32 %v896, %v932
        %v965 = vadd.f32 %v897, %v933
        %v966 = vadd.f32 %v898, %v934
        %v967 = vadd.f32 %v899, %v935
        %v968 = vadd.f32 %v900, %v936
        %v969 = vadd.f32 %v901, %v937
        %v970 = vadd.f32 %v902, %v938
        %v971 = vadd.f32 %v903, %v939
        %v972 = vadd.f32 %v904, %v940
        %v973 = vadd.f32 %v905, %v941
        %v974 = vadd.f32 %v906, %v942
        %v975 = vadd.f32 %v907, %v943
        %v976 = vadd.f32 %v908, %v944
        %v977 = vlaneseq
        %v978 = vshrl.u32 %v977, 7
        %v979 = vsub.s32 0, %v978
        %v980 = vrot.slane %v803, %v979
        %v981 = vmul.f32 %v674, %v980
        %v982 = vmul.f32 %v675, %v980
        %v983 = vmul.f32 %v676, %v980
        %v984 = vmul.f32 %v677, %v980
        %v985 = vmul.f32 %v678, %v980
        %v986 = vmul.f32 %v679, %v980
        %v987 = vmul.f32 %v680, %v980
        %v988 = vmul.f32 %v681, %v980
        %v989 = vmul.f32 %v682, %v980
        %v990 = vmul.f32 %v683, %v980
        %v991 = vmul.f32 %v684, %v980
        %v992 = vmul.f32 %v685, %v980
        %v993 = vmul.f32 %v686, %v980
        %v994 = vmul.f32 %v687, %v980
        %v995 = vmul.f32 %v688, %v980
        %v996 = vmul.f32 %v689, %v980
        %v997 = vmul.f32 %v690, %v980
        %v998 = vmul.f32 %v691, %v980
        %v999 = vmul.f32 %v692, %v980
        %v1000 = vmul.f32 %v693, %v980
        %v1001 = vmul.f32 %v694, %v980
        %v1002 = vmul.f32 %v695, %v980
        %v1003 = vmul.f32 %v696, %v980
        %v1004 = vmul.f32 %v697, %v980
        %v1005 = vmul.f32 %v698, %v980
        %v1006 = vmul.f32 %v699, %v980
        %v1007 = vmul.f32 %v700, %v980
        %v1008 = vmul.f32 %v701, %v980
        %v1009 = vmul.f32 %v702, %v980
        %v1010 = vmul.f32 %v703, %v980
        %v1011 = vlaneseq
        %v1012 = vshrl.u32 %v1011, 7
        %v1013 = vsub.s32 1, %v1012
        %v1014 = vrot.slane %v803, %v1013
        %v1015 = vmul.f32 %v566, %v1014
        %v1016 = vmul.f32 %v567, %v1014
        %v1017 = vmul.f32 %v568, %v1014
        %v1018 = vmul.f32 %v569, %v1014
        %v1019 = vmul.f32 %v570, %v1014
        %v1020 = vmul.f32 %v571, %v1014
        %v1021 = vmul.f32 %v572, %v1014
        %v1022 = vmul.f32 %v573, %v1014
        %v1023 = vmul.f32 %v574, %v1014
        %v1024 = vmul.f32 %v575, %v1014
        %v1025 = vmul.f32 %v576, %v1014
        %v1026 = vmul.f32 %v577, %v1014
        %v1027 = vmul.f32 %v578, %v1014
        %v1028 = vmul.f32 %v579, %v1014
        %v1029 = vmul.f32 %v580, %v1014
        %v1030 = vmul.f32 %v581, %v1014
        %v1031 = vmul.f32 %v582, %v1014
        %v1032 = vmul.f32 %v583, %v1014
        %v1033 = vmul.f32 %v584, %v1014
        %v1034 = vmul.f32 %v585, %v1014
        %v1035 = vmul.f32 %v586, %v1014
        %v1036 = vmul.f32 %v587, %v1014
        %v1037 = vmul.f32 %v588, %v1014
        %v1038 = vmul.f32 %v589, %v1014
        %v1039 = vmul.f32 %v590, %v1014
        %v1040 = vmul.f32 %v591, %v1014
        %v1041 = vmul.f32 %v592, %v1014
        %v1042 = vmul.f32 %v593, %v1014
        %v1043 = vmul.f32 %v594, %v1014
        %v1044 = vmul.f32 %v595, %v1014
        %v1045 = vadd.f32 %v981, %v1015
        %v1046 = vadd.f32 %v982, %v1016
        %v1047 = vadd.f32 %v983, %v1017
        %v1048 = vadd.f32 %v984, %v1018
        %v1049 = vadd.f32 %v985, %v1019
        %v1050 = vadd.f32 %v986, %v1020
        %v1051 = vadd.f32 %v987, %v1021
        %v1052 = vadd.f32 %v988, %v1022
        %v1053 = vadd.f32 %v989, %v1023
        %v1054 = vadd.f32 %v990, %v1024
        %v1055 = vadd.f32 %v991, %v1025
        %v1056 = vadd.f32 %v992, %v1026
        %v1057 = vadd.f32 %v993, %v1027
        %v1058 = vadd.f32 %v994, %v1028
        %v1059 = vadd.f32 %v995, %v1029
        %v1060 = vadd.f32 %v996, %v1030
        %v1061 = vadd.f32 %v997, %v1031
        %v1062 = vadd.f32 %v998, %v1032
        %v1063 = vadd.f32 %v999, %v1033
        %v1064 = vadd.f32 %v1000, %v1034
        %v1065 = vadd.f32 %v1001, %v1035
        %v1066 = vadd.f32 %v1002, %v1036
        %v1067 = vadd.f32 %v1003, %v1037
        %v1068 = vadd.f32 %v1004, %v1038
        %v1069 = vadd.f32 %v1005, %v1039
        %v1070 = vadd.f32 %v1006, %v1040
        %v1071 = vadd.f32 %v1007, %v1041
        %v1072 = vadd.f32 %v1008, %v1042
        %v1073 = vadd.f32 %v1009, %v1043
        %v1074 = vadd.f32 %v1010, %v1044
        %v1075 = vlaneseq
        %v1076 = vshrl.u32 %v1075, 7
        %v1077 = vsub.s32 2, %v1076
        %v1078 = vrot.slane %v803, %v1077
        %v1079 = vmul.f32 %v771, %v1078
        %v1080 = vmul.f32 %v772, %v1078
        %v1081 = vmul.f32 %v773, %v1078
        %v1082 = vmul.f32 %v774, %v1078
        %v1083 = vmul.f32 %v775, %v1078
        %v1084 = vmul.f32 %v776, %v1078
        %v1085 = vmul.f32 %v777, %v1078
        %v1086 = vmul.f32 %v778, %v1078
        %v1087 = vmul.f32 %v779, %v1078
        %v1088 = vmul.f32 %v780, %v1078
        %v1089 = vmul.f32 %v781, %v1078
        %v1090 = vmul.f32 %v782, %v1078
        %v1091 = vmul.f32 %v783, %v1078
        %v1092 = vmul.f32 %v784, %v1078
        %v1093 = vmul.f32 %v785, %v1078
        %v1094 = vmul.f32 %v786, %v1078
        %v1095 = vmul.f32 %v787, %v1078
        %v1096 = vmul.f32 %v788, %v1078
        %v1097 = vmul.f32 %v789, %v1078
        %v1098 = vmul.f32 %v790, %v1078
        %v1099 = vmul.f32 %v791, %v1078
        %v1100 = vmul.f32 %v792, %v1078
        %v1101 = vmul.f32 %v793, %v1078
        %v1102 = vmul.f32 %v794, %v1078
        %v1103 = vmul.f32 %v795, %v1078
        %v1104 = vmul.f32 %v796, %v1078
        %v1105 = vmul.f32 %v797, %v1078
        %v1106 = vmul.f32 %v798, %v1078
        %v1107 = vmul.f32 %v799, %v1078
        %v1108 = vmul.f32 %v800, %v1078
        %v1109 = vadd.f32 %v1045, %v1079
        %v1110 = vadd.f32 %v1046, %v1080
        %v1111 = vadd.f32 %v1047, %v1081
        %v1112 = vadd.f32 %v1048, %v1082
        %v1113 = vadd.f32 %v1049, %v1083
        %v1114 = vadd.f32 %v1050, %v1084
        %v1115 = vadd.f32 %v1051, %v1085
        %v1116 = vadd.f32 %v1052, %v1086
        %v1117 = vadd.f32 %v1053, %v1087
        %v1118 = vadd.f32 %v1054, %v1088
        %v1119 = vadd.f32 %v1055, %v1089
        %v1120 = vadd.f32 %v1056, %v1090
        %v1121 = vadd.f32 %v1057, %v1091
        %v1122 = vadd.f32 %v1058, %v1092
        %v1123 = vadd.f32 %v1059, %v1093
        %v1124 = vadd.f32 %v1060, %v1094
        %v1125 = vadd.f32 %v1061, %v1095
        %v1126 = vadd.f32 %v1062, %v1096
        %v1127 = vadd.f32 %v1063, %v1097
        %v1128 = vadd.f32 %v1064, %v1098
        %v1129 = vadd.f32 %v1065, %v1099
        %v1130 = vadd.f32 %v1066, %v1100
        %v1131 = vadd.f32 %v1067, %v1101
        %v1132 = vadd.f32 %v1068, %v1102
        %v1133 = vadd.f32 %v1069, %v1103
        %v1134 = vadd.f32 %v1070, %v1104
        %v1135 = vadd.f32 %v1071, %v1105
        %v1136 = vadd.f32 %v1072, %v1106
        %v1137 = vadd.f32 %v1073, %v1107
        %v1138 = vadd.f32 %v1074, %v1108
        %v1139 = vadd.f32 %v945, 0.0
        %v1140 = vadd.f32 %v946, 0.0
        %v1141 = vadd.f32 %v947, %v1109
        %v1142 = vadd.f32 %v948, %v1110
        %v1143 = vadd.f32 %v949, %v1111
        %v1144 = vadd.f32 %v950, %v1112
        %v1145 = vadd.f32 %v951, %v1113
        %v1146 = vadd.f32 %v952, %v1114
        %v1147 = vadd.f32 %v953, %v1115
        %v1148 = vadd.f32 %v954, %v1116
        %v1149 = vadd.f32 %v955, %v1117
        %v1150 = vadd.f32 %v956, %v1118
        %v1151 = vadd.f32 %v957, %v1119
        %v1152 = vadd.f32 %v958, %v1120
        %v1153 = vadd.f32 %v959, %v1121
        %v1154 = vadd.f32 %v960, %v1122
        %v1155 = vadd.f32 %v961, %v1123
        %v1156 = vadd.f32 %v962, %v1124
        %v1157 = vadd.f32 %v963, %v1125
        %v1158 = vadd.f32 %v964, %v1126
        %v1159 = vadd.f32 %v965, %v1127
        %v1160 = vadd.f32 %v966, %v1128
        %v1161 = vadd.f32 %v967, %v1129
        %v1162 = vadd.f32 %v968, %v1130
        %v1163 = vadd.f32 %v969, %v1131
        %v1164 = vadd.f32 %v970, %v1132
        %v1165 = vadd.f32 %v971, %v1133
        %v1166 = vadd.f32 %v972, %v1134
        %v1167 = vadd.f32 %v973, %v1135
        %v1168 = vadd.f32 %v974, %v1136
        %v1169 = vadd.f32 %v975, %v1137
        %v1170 = vadd.f32 %v976, %v1138
        %v1171 = vlaneseq
        %v1172 = vshrl.u32 %v1171, 7
        %v1173 = vsub.s32 6, %v1172
        %v1174 = vrot.slane %v803, %v1173
        %v1175 = vmul.f32 %v676, %v1174
        %v1176 = vmul.f32 %v677, %v1174
        %v1177 = vmul.f32 %v678, %v1174
        %v1178 = vmul.f32 %v679, %v1174
        %v1179 = vmul.f32 %v680, %v1174
        %v1180 = vmul.f32 %v681, %v1174
        %v1181 = vmul.f32 %v682, %v1174
        %v1182 = vmul.f32 %v683, %v1174
        %v1183 = vmul.f32 %v684, %v1174
        %v1184 = vmul.f32 %v685, %v1174
        %v1185 = vmul.f32 %v686, %v1174
        %v1186 = vmul.f32 %v687, %v1174
        %v1187 = vmul.f32 %v688, %v1174
        %v1188 = vmul.f32 %v689, %v1174
        %v1189 = vmul.f32 %v690, %v1174
        %v1190 = vmul.f32 %v691, %v1174
        %v1191 = vmul.f32 %v692, %v1174
        %v1192 = vmul.f32 %v693, %v1174
        %v1193 = vmul.f32 %v694, %v1174
        %v1194 = vmul.f32 %v695, %v1174
        %v1195 = vmul.f32 %v696, %v1174
        %v1196 = vmul.f32 %v697, %v1174
        %v1197 = vmul.f32 %v698, %v1174
        %v1198 = vmul.f32 %v699, %v1174
        %v1199 = vmul.f32 %v700, %v1174
        %v1200 = vmul.f32 %v701, %v1174
        %v1201 = vmul.f32 %v702, %v1174
        %v1202 = vmul.f32 %v703, %v1174
        %v1203 = vmul.f32 %v704, %v1174
        %v1204 = vmul.f32 %v705, %v1174
        %v1205 = vlaneseq
        %v1206 = vshrl.u32 %v1205, 7
        %v1207 = vsub.s32 7, %v1206
        %v1208 = vrot.slane %v803, %v1207
        %v1209 = vmul.f32 %v568, %v1208
        %v1210 = vmul.f32 %v569, %v1208
        %v1211 = vmul.f32 %v570, %v1208
        %v1212 = vmul.f32 %v571, %v1208
        %v1213 = vmul.f32 %v572, %v1208
        %v1214 = vmul.f32 %v573, %v1208
        %v1215 = vmul.f32 %v574, %v1208
        %v1216 = vmul.f32 %v575, %v1208
        %v1217 = vmul.f32 %v576, %v1208
        %v1218 = vmul.f32 %v577, %v1208
        %v1219 = vmul.f32 %v578, %v1208
        %v1220 = vmul.f32 %v579, %v1208
        %v1221 = vmul.f32 %v580, %v1208
        %v1222 = vmul.f32 %v581, %v1208
        %v1223 = vmul.f32 %v582, %v1208
        %v1224 = vmul.f32 %v583, %v1208
        %v1225 = vmul.f32 %v584, %v1208
        %v1226 = vmul.f32 %v585, %v1208
        %v1227 = vmul.f32 %v586, %v1208
        %v1228 = vmul.f32 %v587, %v1208
        %v1229 = vmul.f32 %v588, %v1208
        %v1230 = vmul.f32 %v589, %v1208
        %v1231 = vmul.f32 %v590, %v1208
        %v1232 = vmul.f32 %v591, %v1208
        %v1233 = vmul.f32 %v592, %v1208
        %v1234 = vmul.f32 %v593, %v1208
        %v1235 = vmul.f32 %v594, %v1208
        %v1236 = vmul.f32 %v595, %v1208
        %v1237 = vmul.f32 %v596, %v1208
        %v1238 = vmul.f32 %v597, %v1208
        %v1239 = vadd.f32 %v1175, %v1209
        %v1240 = vadd.f32 %v1176, %v1210
        %v1241 = vadd.f32 %v1177, %v1211
        %v1242 = vadd.f32 %v1178, %v1212
        %v1243 = vadd.f32 %v1179, %v1213
        %v1244 = vadd.f32 %v1180, %v1214
        %v1245 = vadd.f32 %v1181, %v1215
        %v1246 = vadd.f32 %v1182, %v1216
        %v1247 = vadd.f32 %v1183, %v1217
        %v1248 = vadd.f32 %v1184, %v1218
        %v1249 = vadd.f32 %v1185, %v1219
        %v1250 = vadd.f32 %v1186, %v1220
        %v1251 = vadd.f32 %v1187, %v1221
        %v1252 = vadd.f32 %v1188, %v1222
        %v1253 = vadd.f32 %v1189, %v1223
        %v1254 = vadd.f32 %v1190, %v1224
        %v1255 = vadd.f32 %v1191, %v1225
        %v1256 = vadd.f32 %v1192, %v1226
        %v1257 = vadd.f32 %v1193, %v1227
        %v1258 = vadd.f32 %v1194, %v1228
        %v1259 = vadd.f32 %v1195, %v1229
        %v1260 = vadd.f32 %v1196, %v1230
        %v1261 = vadd.f32 %v1197, %v1231
        %v1262 = vadd.f32 %v1198, %v1232
        %v1263 = vadd.f32 %v1199, %v1233
        %v1264 = vadd.f32 %v1200, %v1234
        %v1265 = vadd.f32 %v1201, %v1235
        %v1266 = vadd.f32 %v1202, %v1236
        %v1267 = vadd.f32 %v1203, %v1237
        %v1268 = vadd.f32 %v1204, %v1238
        %v1269 = vlaneseq
        %v1270 = vshrl.u32 %v1269, 7
        %v1271 = vsub.s32 0, %v1270
        %v1272 = vrot.slane %v804, %v1271
        %v1273 = vmul.f32 %v773, %v1272
        %v1274 = vmul.f32 %v774, %v1272
        %v1275 = vmul.f32 %v775, %v1272
        %v1276 = vmul.f32 %v776, %v1272
        %v1277 = vmul.f32 %v777, %v1272
        %v1278 = vmul.f32 %v778, %v1272
        %v1279 = vmul.f32 %v779, %v1272
        %v1280 = vmul.f32 %v780, %v1272
        %v1281 = vmul.f32 %v781, %v1272
        %v1282 = vmul.f32 %v782, %v1272
        %v1283 = vmul.f32 %v783, %v1272
        %v1284 = vmul.f32 %v784, %v1272
        %v1285 = vmul.f32 %v785, %v1272
        %v1286 = vmul.f32 %v786, %v1272
        %v1287 = vmul.f32 %v787, %v1272
        %v1288 = vmul.f32 %v788, %v1272
        %v1289 = vmul.f32 %v789, %v1272
        %v1290 = vmul.f32 %v790, %v1272
        %v1291 = vmul.f32 %v791, %v1272
        %v1292 = vmul.f32 %v792, %v1272
        %v1293 = vmul.f32 %v793, %v1272
        %v1294 = vmul.f32 %v794, %v1272
        %v1295 = vmul.f32 %v795, %v1272
        %v1296 = vmul.f32 %v796, %v1272
        %v1297 = vmul.f32 %v797, %v1272
        %v1298 = vmul.f32 %v798, %v1272
        %v1299 = vmul.f32 %v799, %v1272
        %v1300 = vmul.f32 %v800, %v1272
        %v1301 = vmul.f32 %v801, %v1272
        %v1302 = vmul.f32 %v802, %v1272
        %v1303 = vadd.f32 %v1239, %v1273
        %v1304 = vadd.f32 %v1240, %v1274
        %v1305 = vadd.f32 %v1241, %v1275
        %v1306 = vadd.f32 %v1242, %v1276
        %v1307 = vadd.f32 %v1243, %v1277
        %v1308 = vadd.f32 %v1244, %v1278
        %v1309 = vadd.f32 %v1245, %v1279
        %v1310 = vadd.f32 %v1246, %v1280
        %v1311 = vadd.f32 %v1247, %v1281
        %v1312 = vadd.f32 %v1248, %v1282
        %v1313 = vadd.f32 %v1249, %v1283
        %v1314 = vadd.f32 %v1250, %v1284
        %v1315 = vadd.f32 %v1251, %v1285
        %v1316 = vadd.f32 %v1252, %v1286
        %v1317 = vadd.f32 %v1253, %v1287
        %v1318 = vadd.f32 %v1254, %v1288
        %v1319 = vadd.f32 %v1255, %v1289
        %v1320 = vadd.f32 %v1256, %v1290
        %v1321 = vadd.f32 %v1257, %v1291
        %v1322 = vadd.f32 %v1258, %v1292
        %v1323 = vadd.f32 %v1259, %v1293
        %v1324 = vadd.f32 %v1260, %v1294
        %v1325 = vadd.f32 %v1261, %v1295
        %v1326 = vadd.f32 %v1262, %v1296
        %v1327 = vadd.f32 %v1263, %v1297
        %v1328 = vadd.f32 %v1264, %v1298
        %v1329 = vadd.f32 %v1265, %v1299
        %v1330 = vadd.f32 %v1266, %v1300
        %v1331 = vadd.f32 %v1267, %v1301
        %v1332 = vadd.f32 %v1268, %v1302
        %v1333 = vadd.f32 %v1139, %v1303
        %v1334 = vadd.f32 %v1140, %v1304
        %v1335 = vadd.f32 %v1141, %v1305
        %v1336 = vadd.f32 %v1142, %v1306
        %v1337 = vadd.f32 %v1143, %v1307
        %v1338 = vadd.f32 %v1144, %v1308
        %v1339 = vadd.f32 %v1145, %v1309
        %v1340 = vadd.f32 %v1146, %v1310
        %v1341 = vadd.f32 %v1147, %v1311
        %v1342 = vadd.f32 %v1148, %v1312
        %v1343 = vadd.f32 %v1149, %v1313
        %v1344 = vadd.f32 %v1150, %v1314
        %v1345 = vadd.f32 %v1151, %v1315
        %v1346 = vadd.f32 %v1152, %v1316
        %v1347 = vadd.f32 %v1153, %v1317
        %v1348 = vadd.f32 %v1154, %v1318
        %v1349 = vadd.f32 %v1155, %v1319
        %v1350 = vadd.f32 %v1156, %v1320
        %v1351 = vadd.f32 %v1157, %v1321
        %v1352 = vadd.f32 %v1158, %v1322
        %v1353 = vadd.f32 %v1159, %v1323
        %v1354 = vadd.f32 %v1160, %v1324
        %v1355 = vadd.f32 %v1161, %v1325
        %v1356 = vadd.f32 %v1162, %v1326
        %v1357 = vadd.f32 %v1163, %v1327
        %v1358 = vadd.f32 %v1164, %v1328
        %v1359 = vadd.f32 %v1165, %v1329
        %v1360 = vadd.f32 %v1166, %v1330
        %v1361 = vadd.f32 %v1167, %v1331
        %v1362 = vadd.f32 %v1168, %v1332
        %v1363 = vadd.f32 %v1169, 0.0
        %v1364 = vadd.f32 %v1170, 0.0
        %v1365 = vpack.c.bf16 %v1334, %v1333
        %v1366 = vpack.c.bf16 %v1336, %v1335
        %v1367 = vpack.c.bf16 %v1338, %v1337
        %v1368 = vpack.c.bf16 %v1340, %v1339
        %v1369 = vpack.c.bf16 %v1342, %v1341
        %v1370 = vpack.c.bf16 %v1344, %v1343
        %v1371 = vpack.c.bf16 %v1346, %v1345
        %v1372 = vpack.c.bf16 %v1348, %v1347
        %v1373 = vpack.c.bf16 %v1350, %v1349
        %v1374 = vpack.c.bf16 %v1352, %v1351
        %v1375 = vpack.c.bf16 %v1354, %v1353
        %v1376 = vpack.c.bf16 %v1356, %v1355
        %v1377 = vpack.c.bf16 %v1358, %v1357
        %v1378 = vpack.c.bf16 %v1360, %v1359
        %v1379 = vpack.c.bf16 %v1362, %v1361
        %v1380 = vpack.c.bf16 %v1364, %v1363
        %v1381 = vld [vmem:[#allocation7] sm:$0xf]
        %v1382 = vld [vmem:[#allocation7 + $0x4] sm:$0xf]
        %v1383 = vld [vmem:[#allocation7 + $0x8] sm:$0xf]
        %v1384 = vld [vmem:[#allocation7 + $0xc] sm:$0xf]
        %v1385 = vld [vmem:[#allocation7 + $0x10] sm:$0xf]
        %v1386 = vld [vmem:[#allocation7 + $0x14] sm:$0xf]
        %v1387 = vld [vmem:[#allocation7 + $0x18] sm:$0xf]
        %v1388 = vld [vmem:[#allocation7 + $0x1c] sm:$0xf]
        %v1389 = vld [vmem:[#allocation7 + $0x20] sm:$0xf]
        %v1390 = vld [vmem:[#allocation7 + $0x24] sm:$0xf]
        %v1391 = vld [vmem:[#allocation7 + $0x28] sm:$0xf]
        %v1392 = vld [vmem:[#allocation7 + $0x2c] sm:$0xf]
        %v1393 = vld [vmem:[#allocation7 + $0x30] sm:$0xf]
        %v1394 = vld [vmem:[#allocation7 + $0x34] sm:$0xf]
        %v1395 = vld [vmem:[#allocation7 + $0x38] sm:$0xf]
        %v1396 = vld [vmem:[#allocation7 + $0x3c] sm:$0xf]
        %v1397 = vld [vmem:[%s4 + $0x1] sm:$0x1]
        %v1398 = vlaneseq
        %v1399 = vshrl.u32 %v1398, 7
        %v1400 = vsub.s32 0, %v1399
        %v1401 = vrot.slane %v1397, %v1400
        %v1418 = vunpack.c.l.b16 %v1381
        %v1419 = vunpack.c.l.b16 %v1382
        %v1420 = vunpack.c.l.b16 %v1383
        %v1421 = vunpack.c.l.b16 %v1384
        %v1422 = vunpack.c.l.b16 %v1385
        %v1423 = vunpack.c.l.b16 %v1386
        %v1424 = vunpack.c.l.b16 %v1387
        %v1425 = vunpack.c.l.b16 %v1388
        %v1426 = vunpack.c.l.b16 %v1389
        %v1427 = vunpack.c.l.b16 %v1390
        %v1428 = vunpack.c.l.b16 %v1391
        %v1429 = vunpack.c.l.b16 %v1392
        %v1430 = vunpack.c.l.b16 %v1393
        %v1431 = vunpack.c.l.b16 %v1394
        %v1432 = vunpack.c.l.b16 %v1395
        %v1433 = vunpack.c.l.b16 %v1396
        %v1434 = vpack.c.b16 %v1419, %v1418
        %v1435 = vpack.c.b16 %v1421, %v1420
        %v1436 = vpack.c.b16 %v1423, %v1422
        %v1437 = vpack.c.b16 %v1425, %v1424
        %v1438 = vpack.c.b16 %v1427, %v1426
        %v1439 = vpack.c.b16 %v1429, %v1428
        %v1440 = vpack.c.b16 %v1431, %v1430
        %v1441 = vpack.c.b16 %v1433, %v1432
        %1450 = vmatprep.subr.bf16.mxu0 0
        %1451 = vmatpush1.bf16.msra.mxu0 %v1441
        %1452 = vmatprep.subr.bf16.mxu0 0
        %1453 = vmatpush1.bf16.msra.mxu0 %v1440
        %1454 = vmatprep.subr.bf16.mxu0 0
        %1455 = vmatpush1.bf16.msra.mxu0 %v1439
        %1456 = vmatprep.subr.bf16.mxu0 0
        %1457 = vmatpush1.bf16.msra.mxu0 %v1438
        %1458 = vmatprep.subr.bf16.mxu0 0
        %1459 = vmatpush1.bf16.msra.mxu0 %v1437
        %1460 = vmatprep.subr.bf16.mxu0 0
        %1461 = vmatpush1.bf16.msra.mxu0 %v1436
        %1462 = vmatprep.subr.bf16.mxu0 0
        %1463 = vmatpush1.bf16.msra.mxu0 %v1435
        %1464 = vmatprep.subr.bf16.mxu0 0
        %1465 = vmatpush1.bf16.msra.mxu0 %v1434
        %1466 = vmatprep.subr.bf16.mxu0 0
        %1467 = vmatpush2.bf16.msra.mxu0 0
        %1468 = vmatprep.subr.bf16.mxu0 0
        %1469 = vmatpush2.bf16.msra.mxu0 0
        %1470 = vmatprep.subr.bf16.mxu0 0
        %1471 = vmatpush2.bf16.msra.mxu0 0
        %1472 = vmatprep.subr.bf16.mxu0 0
        %1473 = vmatpush2.bf16.msra.mxu0 0
        %1474 = vmatprep.subr.bf16.mxu0 0
        %1475 = vmatpush2.bf16.msra.mxu0 0
        %1476 = vmatprep.subr.bf16.mxu0 0
        %1477 = vmatpush2.bf16.msra.mxu0 0
        %1478 = vmatprep.subr.bf16.mxu0 0
        %1479 = vmatpush2.bf16.msra.mxu0 0
        %1480 = vmatprep.subr.bf16.mxu0 0
        %1481 = vmatpush2.bf16.msra.mxu0 0
        %1482 = vmatprep.mubr.bf16.mxu0 0
        %1483 = vmatmul.mubr.bf16.gmra.mxu0 %v1365
        %v1484 = vpop.f32.mrf.mxu0
        %v1485 = vadd.f32 %v1401, %v1484
        %v1486 = vpop.f32.mrf.mxu0
        %v1487 = vpop.f32.mrf.mxu0
        %v1488 = vadd.f32 %v1401, %v1487
        %v1489 = vpop.f32.mrf.mxu0
        %1490 = vmatprep.mubr.bf16.mxu0 0
        %1491 = vmatmul.mubr.bf16.gmra.mxu0 %v1366
        %v1492 = vpop.f32.mrf.mxu0
        %v1493 = vadd.f32 %v1401, %v1492
        %v1494 = vpop.f32.mrf.mxu0
        %v1495 = vpop.f32.mrf.mxu0
        %v1496 = vadd.f32 %v1401, %v1495
        %v1497 = vpop.f32.mrf.mxu0
        %1498 = vmatprep.mubr.bf16.mxu0 0
        %1499 = vmatmul.mubr.bf16.gmra.mxu0 %v1367
        %v1500 = vpop.f32.mrf.mxu0
        %v1501 = vadd.f32 %v1401, %v1500
        %v1502 = vpop.f32.mrf.mxu0
        %v1503 = vpop.f32.mrf.mxu0
        %v1504 = vadd.f32 %v1401, %v1503
        %v1505 = vpop.f32.mrf.mxu0
        %1506 = vmatprep.mubr.bf16.mxu0 0
        %1507 = vmatmul.mubr.bf16.gmra.mxu0 %v1368
        %v1508 = vpop.f32.mrf.mxu0
        %v1509 = vadd.f32 %v1401, %v1508
        %v1510 = vpop.f32.mrf.mxu0
        %v1511 = vpop.f32.mrf.mxu0
        %v1512 = vadd.f32 %v1401, %v1511
        %v1513 = vpop.f32.mrf.mxu0
        %1514 = vmatprep.mubr.bf16.mxu0 0
        %1515 = vmatmul.mubr.bf16.gmra.mxu0 %v1369
        %v1516 = vpop.f32.mrf.mxu0
        %v1517 = vadd.f32 %v1401, %v1516
        %v1518 = vpop.f32.mrf.mxu0
        %v1519 = vpop.f32.mrf.mxu0
        %v1520 = vadd.f32 %v1401, %v1519
        %v1521 = vpop.f32.mrf.mxu0
        %1522 = vmatprep.mubr.bf16.mxu0 0
        %1523 = vmatmul.mubr.bf16.gmra.mxu0 %v1370
        %v1524 = vpop.f32.mrf.mxu0
        %v1525 = vadd.f32 %v1401, %v1524
        %v1526 = vpop.f32.mrf.mxu0
        %v1527 = vpop.f32.mrf.mxu0
        %v1528 = vadd.f32 %v1401, %v1527
        %v1529 = vpop.f32.mrf.mxu0
        %1530 = vmatprep.mubr.bf16.mxu0 0
        %1531 = vmatmul.mubr.bf16.gmra.mxu0 %v1371
        %v1532 = vpop.f32.mrf.mxu0
        %v1533 = vadd.f32 %v1401, %v1532
        %v1534 = vpop.f32.mrf.mxu0
        %v1535 = vpop.f32.mrf.mxu0
        %v1536 = vadd.f32 %v1401, %v1535
        %v1537 = vpop.f32.mrf.mxu0
        %1538 = vmatprep.mubr.bf16.mxu0 0
        %1539 = vmatmul.mubr.bf16.gmra.mxu0 %v1372
        %v1540 = vpop.f32.mrf.mxu0
        %v1541 = vadd.f32 %v1401, %v1540
        %v1542 = vpop.f32.mrf.mxu0
        %v1543 = vpop.f32.mrf.mxu0
        %v1544 = vadd.f32 %v1401, %v1543
        %v1545 = vpop.f32.mrf.mxu0
        %1546 = vmatprep.mubr.bf16.mxu0 0
        %1547 = vmatmul.mubr.bf16.gmra.mxu0 %v1373
        %v1548 = vpop.f32.mrf.mxu0
        %v1549 = vadd.f32 %v1401, %v1548
        %v1550 = vpop.f32.mrf.mxu0
        %v1551 = vpop.f32.mrf.mxu0
        %v1552 = vadd.f32 %v1401, %v1551
        %v1553 = vpop.f32.mrf.mxu0
        %1554 = vmatprep.mubr.bf16.mxu0 0
        %1555 = vmatmul.mubr.bf16.gmra.mxu0 %v1374
        %v1556 = vpop.f32.mrf.mxu0
        %v1557 = vadd.f32 %v1401, %v1556
        %v1558 = vpop.f32.mrf.mxu0
        %v1559 = vpop.f32.mrf.mxu0
        %v1560 = vadd.f32 %v1401, %v1559
        %v1561 = vpop.f32.mrf.mxu0
        %1562 = vmatprep.mubr.bf16.mxu0 0
        %1563 = vmatmul.mubr.bf16.gmra.mxu0 %v1375
        %v1564 = vpop.f32.mrf.mxu0
        %v1565 = vadd.f32 %v1401, %v1564
        %v1566 = vpop.f32.mrf.mxu0
        %v1567 = vpop.f32.mrf.mxu0
        %v1568 = vadd.f32 %v1401, %v1567
        %v1569 = vpop.f32.mrf.mxu0
        %1570 = vmatprep.mubr.bf16.mxu0 0
        %1571 = vmatmul.mubr.bf16.gmra.mxu0 %v1376
        %v1572 = vpop.f32.mrf.mxu0
        %v1573 = vadd.f32 %v1401, %v1572
        %v1574 = vpop.f32.mrf.mxu0
        %v1575 = vpop.f32.mrf.mxu0
        %v1576 = vadd.f32 %v1401, %v1575
        %v1577 = vpop.f32.mrf.mxu0
        %1578 = vmatprep.mubr.bf16.mxu0 0
        %1579 = vmatmul.mubr.bf16.gmra.mxu0 %v1377
        %v1580 = vpop.f32.mrf.mxu0
        %v1581 = vadd.f32 %v1401, %v1580
        %v1582 = vpop.f32.mrf.mxu0
        %v1583 = vpop.f32.mrf.mxu0
        %v1584 = vadd.f32 %v1401, %v1583
        %v1585 = vpop.f32.mrf.mxu0
        %1586 = vmatprep.mubr.bf16.mxu0 0
        %1587 = vmatmul.mubr.bf16.gmra.mxu0 %v1378
        %v1588 = vpop.f32.mrf.mxu0
        %v1589 = vadd.f32 %v1401, %v1588
        %v1590 = vpop.f32.mrf.mxu0
        %v1591 = vpop.f32.mrf.mxu0
        %v1592 = vadd.f32 %v1401, %v1591
        %v1593 = vpop.f32.mrf.mxu0
        %1594 = vmatprep.mubr.bf16.mxu0 0
        %1595 = vmatmul.mubr.bf16.gmra.mxu0 %v1379
        %v1596 = vpop.f32.mrf.mxu0
        %v1597 = vadd.f32 %v1401, %v1596
        %v1598 = vpop.f32.mrf.mxu0
        %v1599 = vpop.f32.mrf.mxu0
        %v1600 = vadd.f32 %v1401, %v1599
        %v1601 = vpop.f32.mrf.mxu0
        %1602 = vmatprep.mubr.bf16.mxu0 0
        %1603 = vmatmul.mubr.bf16.gmra.mxu0 %v1380
        %v1604 = vpop.f32.mrf.mxu0
        %v1605 = vadd.f32 %v1401, %v1604
        %v1606 = vpop.f32.mrf.mxu0
        %v1607 = vpop.f32.mrf.mxu0
        %v1608 = vadd.f32 %v1401, %v1607
        %v1609 = vpop.f32.mrf.mxu0
        %1610 = vdwg.mxu0
        %v1611 = vmax.f32 %v1485, 0.0
        %v1612 = vmax.f32 %v1488, 0.0
        %v1613 = vmax.f32 %v1493, 0.0
        %v1614 = vmax.f32 %v1496, 0.0
        %v1615 = vmax.f32 %v1501, 0.0
        %v1616 = vmax.f32 %v1504, 0.0
        %v1617 = vmax.f32 %v1509, 0.0
        %v1618 = vmax.f32 %v1512, 0.0
        %v1619 = vmax.f32 %v1517, 0.0
        %v1620 = vmax.f32 %v1520, 0.0
        %v1621 = vmax.f32 %v1525, 0.0
        %v1622 = vmax.f32 %v1528, 0.0
        %v1623 = vmax.f32 %v1533, 0.0
        %v1624 = vmax.f32 %v1536, 0.0
        %v1625 = vmax.f32 %v1541, 0.0
        %v1626 = vmax.f32 %v1544, 0.0
        %v1627 = vmax.f32 %v1549, 0.0
        %v1628 = vmax.f32 %v1552, 0.0
        %v1629 = vmax.f32 %v1557, 0.0
        %v1630 = vmax.f32 %v1560, 0.0
        %v1631 = vmax.f32 %v1565, 0.0
        %v1632 = vmax.f32 %v1568, 0.0
        %v1633 = vmax.f32 %v1573, 0.0
        %v1634 = vmax.f32 %v1576, 0.0
        %v1635 = vmax.f32 %v1581, 0.0
        %v1636 = vmax.f32 %v1584, 0.0
        %v1637 = vmax.f32 %v1589, 0.0
        %v1638 = vmax.f32 %v1592, 0.0
        %v1639 = vmax.f32 %v1597, 0.0
        %v1640 = vmax.f32 %v1600, 0.0
        %v1641 = vmax.f32 %v1605, 0.0
        %v1642 = vmax.f32 %v1608, 0.0
        %v1643 = vadd.f32 %v288, %v1611
        %v1644 = vadd.f32 %v289, %v1612
        %v1645 = vadd.f32 %v290, %v1613
        %v1646 = vadd.f32 %v291, %v1614
        %v1647 = vadd.f32 %v292, %v1615
        %v1648 = vadd.f32 %v293, %v1616
        %v1649 = vadd.f32 %v294, %v1617
        %v1650 = vadd.f32 %v295, %v1618
        %v1651 = vadd.f32 %v296, %v1619
        %v1652 = vadd.f32 %v297, %v1620
        %v1653 = vadd.f32 %v298, %v1621
        %v1654 = vadd.f32 %v299, %v1622
        %v1655 = vadd.f32 %v300, %v1623
        %v1656 = vadd.f32 %v301, %v1624
        %v1657 = vadd.f32 %v302, %v1625
        %v1658 = vadd.f32 %v303, %v1626
        %v1659 = vadd.f32 %v304, %v1627
        %v1660 = vadd.f32 %v305, %v1628
        %v1661 = vadd.f32 %v306, %v1629
        %v1662 = vadd.f32 %v307, %v1630
        %v1663 = vadd.f32 %v308, %v1631
        %v1664 = vadd.f32 %v309, %v1632
        %v1665 = vadd.f32 %v310, %v1633
        %v1666 = vadd.f32 %v311, %v1634
        %v1667 = vadd.f32 %v312, %v1635
        %v1668 = vadd.f32 %v313, %v1636
        %v1669 = vadd.f32 %v314, %v1637
        %v1670 = vadd.f32 %v315, %v1638
        %v1671 = vadd.f32 %v316, %v1639
        %v1672 = vadd.f32 %v317, %v1640
        %v1673 = vadd.f32 %v318, %v1641
        %v1674 = vadd.f32 %v319, %v1642
        %v1675 = vmax.f32 %v1643, 0.0
        %v1676 = vmax.f32 %v1644, 0.0
        %v1677 = vmax.f32 %v1645, 0.0
        %v1678 = vmax.f32 %v1646, 0.0
        %v1679 = vmax.f32 %v1647, 0.0
        %v1680 = vmax.f32 %v1648, 0.0
        %v1681 = vmax.f32 %v1649, 0.0
        %v1682 = vmax.f32 %v1650, 0.0
        %v1683 = vmax.f32 %v1651, 0.0
        %v1684 = vmax.f32 %v1652, 0.0
        %v1685 = vmax.f32 %v1653, 0.0
        %v1686 = vmax.f32 %v1654, 0.0
        %v1687 = vmax.f32 %v1655, 0.0
        %v1688 = vmax.f32 %v1656, 0.0
        %v1689 = vmax.f32 %v1657, 0.0
        %v1690 = vmax.f32 %v1658, 0.0
        %v1691 = vmax.f32 %v1659, 0.0
        %v1692 = vmax.f32 %v1660, 0.0
        %v1693 = vmax.f32 %v1661, 0.0
        %v1694 = vmax.f32 %v1662, 0.0
        %v1695 = vmax.f32 %v1663, 0.0
        %v1696 = vmax.f32 %v1664, 0.0
        %v1697 = vmax.f32 %v1665, 0.0
        %v1698 = vmax.f32 %v1666, 0.0
        %v1699 = vmax.f32 %v1667, 0.0
        %v1700 = vmax.f32 %v1668, 0.0
        %v1701 = vmax.f32 %v1669, 0.0
        %v1702 = vmax.f32 %v1670, 0.0
        %v1703 = vmax.f32 %v1671, 0.0
        %v1704 = vmax.f32 %v1672, 0.0
        %v1705 = vmax.f32 %v1673, 0.0
        %v1706 = vmax.f32 %v1674, 0.0
        %1707 = vst [vmem:[%s286] sm:$0xff] %v1675
        %1708 = vst [vmem:[%s286 + $0x8] sm:$0xff] %v1676
        %1709 = vst [vmem:[%s286 + $0x10] sm:$0xff] %v1677
        %1710 = vst [vmem:[%s286 + $0x18] sm:$0xff] %v1678
        %1711 = vst [vmem:[%s286 + $0x20] sm:$0xff] %v1679
        %1712 = vst [vmem:[%s286 + $0x28] sm:$0xff] %v1680
        %1713 = vst [vmem:[%s286 + $0x30] sm:$0xff] %v1681
        %1714 = vst [vmem:[%s286 + $0x38] sm:$0xff] %v1682
        %1715 = vst [vmem:[%s286 + $0x40] sm:$0xff] %v1683
        %1716 = vst [vmem:[%s286 + $0x48] sm:$0xff] %v1684
        %1717 = vst [vmem:[%s286 + $0x50] sm:$0xff] %v1685
        %1718 = vst [vmem:[%s286 + $0x58] sm:$0xff] %v1686
        %1719 = vst [vmem:[%s286 + $0x60] sm:$0xff] %v1687
        %1720 = vst [vmem:[%s286 + $0x68] sm:$0xff] %v1688
        %1721 = vst [vmem:[%s286 + $0x70] sm:$0xff] %v1689
        %1722 = vst [vmem:[%s286 + $0x78] sm:$0xff] %v1690
        %1723 = vst [vmem:[%s286 + $0x80] sm:$0xff] %v1691
        %1724 = vst [vmem:[%s286 + $0x88] sm:$0xff] %v1692
        %1725 = vst [vmem:[%s286 + $0x90] sm:$0xff] %v1693
        %1726 = vst [vmem:[%s286 + $0x98] sm:$0xff] %v1694
        %1727 = vst [vmem:[%s286 + $0xa0] sm:$0xff] %v1695
        %1728 = vst [vmem:[%s286 + $0xa8] sm:$0xff] %v1696
        %1729 = vst [vmem:[%s286 + $0xb0] sm:$0xff] %v1697
        %1730 = vst [vmem:[%s286 + $0xb8] sm:$0xff] %v1698
        %1731 = vst [vmem:[%s286 + $0xc0] sm:$0xff] %v1699
        %1732 = vst [vmem:[%s286 + $0xc8] sm:$0xff] %v1700
        %1733 = vst [vmem:[%s286 + $0xd0] sm:$0xff] %v1701
        %1734 = vst [vmem:[%s286 + $0xd8] sm:$0xff] %v1702
        %1735 = vst [vmem:[%s286 + $0xe0] sm:$0xff] %v1703
        %1736 = vst [vmem:[%s286 + $0xe8] sm:$0xff] %v1704
        %1737 = vst [vmem:[%s286 + $0xf0] sm:$0xff] %v1705
        %1738 = vst [vmem:[%s286 + $0xf8] sm:$0xff] %v1706
        %s1739 = sand.u32 %s142, 1
        %s1740 = scalar_lea.sflag [#allocation4], %s1739
        %s1741 = sand.u32 %s142, 1
        %s1742 = smul.addr %s1741, 256
        %s1743 = scalar_lea.vmem [#allocation10], %s1742
        // Predicated region
        $region57: #{tpu_custom_call.1} parent=39 // pred_check
          %p1744 = pneg %p152
        $region58: #{tpu_custom_call.1} parent=39 // pred_check_branch
          %1746 = sbr.rel (%p1744) target = $region60
        $region59: #{tpu_custom_call.1} parent=39 // pred_region
          %s1748 = ssub.s32 4096, 4096
          %1749 = vsyncadd %s1740, %s1748
          %s1750 = smul.addr %s24, 32
          %s1751 = smul.addr %s1750, 128
          %s1752 = scalar_lea.hbm %s5, %s1751
          %s1753 = sshll.u32 %s1743, 4
          %s1754 = int_to_ptr.vmem [resolvable:$true] %s1753
          %1759 = dma.vmem_to_hbm [thread:$0]  %s1754, 4096, %s1752, %s1740, 128, 128, 8
        $region60: #{tpu_custom_call.1} parent=39 // pred_fallthru
          _
      $region40: #{tpu_custom_call.1} parent=5 // pred_fallthru
        _
      %p1760 = scmp.le.s32.totalorder 2, %s19
      // Predicated region
      $region61: #{tpu_custom_call.1} parent=5 // pred_check
        %p1761 = pneg %p1760
      $region62: #{tpu_custom_call.1} parent=5 // pred_check_branch
        %1763 = sbr.rel (%p1761) target = $region64
      $region63: #{tpu_custom_call.1} parent=5 // pred_region
        %s1764 = ssub.s32 %s19, 2
        // Predicated region
        $region65: #{tpu_custom_call.1} parent=63 // pred_check
          %p1765 = pneg %p158
        $region66: #{tpu_custom_call.1} parent=63 // pred_check_branch
          %1767 = sbr.rel (%p1765) target = $region68
        $region67: #{tpu_custom_call.1} parent=63 // pred_region
          %s1768 = sand.u32 %s143, 1
          %s1769 = scalar_lea.sflag [#allocation4], %s1768
          %s1770 = sand.u32 %s143, 1
          %s1771 = smul.addr %s1770, 256
          %s1772 = scalar_lea.vmem [#allocation10], %s1771
          %1773 = dma.done %s1769, 4096
        $region68: #{tpu_custom_call.1} parent=63 // pred_fallthru
          _
      $region64: #{tpu_custom_call.1} parent=5 // pred_fallthru
        _
    $region6: #{tpu_custom_call.1} parent=1 // loop_footer
      %s23 = sadd.s32 1, %s19
    $region7: #{tpu_custom_call.1} parent=1 // loop_footer_branch
      %18 = sbr.rel target = $region3
    $region8: #{tpu_custom_call.1} parent=1 // loop_exit
      _
    %1774 = vsyncpa [#allocation3], 1
    %s1775 = scalar_lea.sflag [#allocation3], 1
    %1776 = vsyncpa %s1775, 1
    %1777 = vsyncpa [#allocation6], 1
    %1778 = vsyncpa [#allocation9], 1
    %1779 = vsyncpa [#allocation4], 1
    %s1780 = scalar_lea.sflag [#allocation4], 1
    %1781 = vsyncpa %s1780, 1

</llo_original>
